<compile_context>
chip_gen: v6e
topology: v6e:2x2x1
jax: 0.10.0
libtpu: 0.0.40
codegen_flags: <defaults>
</compile_context>

<pallas_src>
import numpy as np

import jax
import jax.numpy as jnp
from jax import lax
from jax.experimental import pallas as pl
from jax.experimental.pallas import tpu as pltpu


# ----------------------------------------------------------------------------
# Weight packing: fold BN (eval), conv taps, pointwise and the spatial mean
# into dense lane-mixing matrices.  Pure numpy on host, runs once.
# ----------------------------------------------------------------------------

_ORDER = ("m1", "b1", "dmf", "dbf", "rm1", "rb1", "rm2", "rb2",
          "fw1", "f1b", "w2p", "f2b")

OUT_LANES = 128   # lane-dense padded fc2 output width


def pack_operands(params, H, W):
    assert H % 2 == 0 and W % 2 == 0, "even spatial dims expected"
    eps = 1e-5
    C1, C2 = 16, 32
    Wp = W + 2
    Ho, Wo = H // 2, W // 2

    g = lambda k: np.asarray(params[k], np.float32)

    def fold_bn(conv_b, pre):
        scale = g(pre + "_g") / np.sqrt(g(pre + "_v") + eps)
        bias = g(pre + "_b") + (conv_b - g(pre + "_m")) * scale
        return scale, bias

    # --- conv1 (3x3, s1, p1) + BN, emitted in a "row parity in lanes" layout:
    #     input lanes  = rowoff(0..3) * Wp + padded_col
    #     output lanes = parity * (W*C1) + w * C1 + cout
    w1 = g("conv1_w")[:, 0]                              # (C1, 3, 3)
    s1, b1 = fold_bn(g("conv1_b"), "bn1")
    m1 = np.zeros((4 * Wp, 2 * W * C1), np.float32)
    for p in range(2):
        for ky in range(3):
            ro = p + ky                                   # padded row offset
            for kx in range(3):
                for w in range(W):
                    col = p * W * C1 + w * C1
                    m1[ro * Wp + (w + kx), col:col + C1] += w1[:, ky, kx] * s1
    b1row = np.tile(b1, 2 * W).reshape(1, -1)

    # --- depthwise (3x3, s2, p1, groups=16) fused with pointwise (1x1, 16->32)
    #     activation lanes: tap(ky) * (W*C1) + w_in * C1 + c
    wd = g("dw_w")[:, 0]                                  # (C1, 3, 3)
    dm = np.zeros((3 * W * C1, Wo * C1), np.float32)
    for ky in range(3):                                   # 0: 2io-1, 1: 2io, 2: 2io+1
        for kx in range(3):
            for wo in range(Wo):
                win = 2 * wo + kx - 1
                if 0 <= win < W:
                    for c in range(C1):
                        dm[ky * W * C1 + win * C1 + c, wo * C1 + c] += wd[c, ky, kx]
    pw = g("pw_w")[:, :, 0, 0]                            # (C2, C1)
    P = np.zeros((Wo * C1, Wo * C2), np.float32)
    for wo in range(Wo):
        P[wo * C1:(wo + 1) * C1, wo * C2:(wo + 1) * C2] = pw.T
    dmf = dm @ P                                          # (3*W*C1, Wo*C2)
    dbf = (np.tile(g("dw_b"), Wo).reshape(1, -1) @ P
           + np.tile(g("pw_b"), Wo).reshape(1, -1))

    # --- resblock 3x3 convs (s1, p1) + folded BN; lanes = w * C2 + c
    def res_mat(wkey, bkey, bnpre):
        wr = g(wkey)                                      # (C2, C2, 3, 3)
        sc, bi = fold_bn(g(bkey), bnpre)
        m = np.zeros((3 * Wo * C2, Wo * C2), np.float32)
        for ky in range(3):
            for kx in range(3):
                for w in range(Wo):
                    win = w + kx - 1
                    if 0 <= win < Wo:
                        blk = (wr[:, :, ky, kx] * sc[:, None]).T   # (ci, co)
                        r0 = ky * Wo * C2 + win * C2
                        m[r0:r0 + C2, w * C2:(w + 1) * C2] += blk
        return m, np.tile(bi, Wo).reshape(1, -1)

    rm1, rb1 = res_mat("res1_w", "res1_b", "rbn1")
    rm2, rb2 = res_mat("res2_w", "res2_b", "rbn2")

    # --- fc1 with the 1/(Ho*Wo) global mean folded in; fc2 padded to 128 lanes
    fc1w = g("fc1_w")                                     # (256, C2)
    fw1 = np.tile(fc1w.T / (Ho * Wo), (Wo, 1))            # (Wo*C2, 256)
    f1b = g("fc1_b").reshape(1, -1)
    n_c = g("fc2_b").shape[0]
    w2p = np.zeros((fc1w.shape[0], OUT_LANES), np.float32)
    w2p[:, :n_c] = g("fc2_w").T
    f2b = np.zeros((1, OUT_LANES), np.float32)
    f2b[0, :n_c] = g("fc2_b")

    return dict(m1=m1, b1=b1row, dmf=dmf, dbf=dbf, rm1=rm1, rb1=rb1,
                rm2=rm2, rb2=rb2, fw1=fw1, f1b=f1b, w2p=w2p, f2b=f2b)


# ----------------------------------------------------------------------------
# Public forward (eval mode) — one pallas_call, grid over batch blocks.
# ----------------------------------------------------------------------------

def model2_forward(packed, x_nchw, n_c=10):
    N, Ci, H, W = x_nchw.shape
    assert Ci == 1, "Model2 expects 1 input channel"
    assert H % 2 == 0 and W % 2 == 0
    Ho, Wp = H // 2, W + 2

    # batch blocking: B images per grid step (amortizes step overhead, fills MXU rows)
    if N <= 64:
        B, Npad = N, N
    else:
        B = 64
        Npad = -(-N // B) * B

    # conv1 input gather (wrapper-side): for output slab row (n, io) the four
    # padded image rows 2io..2io+3 are concatenated along lanes with all Wp
    # padded columns -> (Npad*Ho, 4*Wp); vertical taps become a single dot.
    xpad = jnp.pad(x_nchw[:, 0].astype(jnp.float32),
                   ((0, Npad - N), (1, 1), (1, 1)))            # (Npad, H+2, W+2)
    xg = jnp.stack([xpad[:, 2 * io:2 * io + 4, :] for io in range(Ho)], axis=1)
    xg = xg.reshape(Npad * Ho, 4 * Wp)

    weights = [jnp.asarray(packed[k], jnp.float32) for k in _ORDER]
    rows = B * Ho

    def kernel(xg_ref, m1_ref, b1_ref, dmf_ref, dbf_ref,
               rm1_ref, rb1_ref, rm2_ref, rb2_ref,
               fw1_ref, f1b_ref, w2_ref, f2b_ref, out_ref):
        f32 = jnp.float32
        r = lax.broadcasted_iota(jnp.int32, (rows, 1), 0)
        not_first = (r % Ho) != 0
        not_last = (r % Ho) != (Ho - 1)

        def shift_down(v):   # row i <- row i-1 of the same image, else 0
            return jnp.where(not_first, pltpu.roll(v, shift=1, axis=0), 0.0)

        def shift_up(v):     # row i <- row i+1 of the same image, else 0
            return jnp.where(not_last, pltpu.roll(v, shift=rows - 1, axis=0), 0.0)

        # conv1 + BN + ReLU : ONE dot; output lanes = [even rows | odd rows] x (w, c)
        y1 = jnp.maximum(
            jnp.dot(xg_ref[...], m1_ref[...], preferred_element_type=f32)
            + b1_ref[...], 0.0)                                 # (rows, 2*W*16)

        # depthwise(stride 2) + pointwise, fused into ONE dot:
        # taps = [row 2io-1 (rolled odd half), row 2io (even half), row 2io+1 (odd half)]
        half = y1.shape[1] // 2
        prev_odd = shift_down(y1[:, half:])
        dcat = jnp.concatenate([prev_odd, y1], axis=1)          # (rows, 3*W*16)
        y3 = (jnp.dot(dcat, dmf_ref[...], preferred_element_type=f32)
              + dbf_ref[...])                                   # (rows, Wo*32)

        # resblock: two 3x3 convs with folded BN, ONE dot each (taps stacked on K)
        def conv3(v, w_ref, b_ref):
            cat = jnp.concatenate([shift_down(v), v, shift_up(v)], axis=1)
            return jnp.dot(cat, w_ref[...], preferred_element_type=f32) + b_ref[...]

        z = jnp.maximum(conv3(y3, rm1_ref, rb1_ref), 0.0)       # DropBlock2D: identity (eval)
        z = conv3(z, rm2_ref, rb2_ref)

        # residual add + ReLU + global spatial mean (1/(Ho*Wo) folded into fw1);
        # the per-image row sum is a sublane reduction, not a matmul.
        s = jnp.maximum(z + y3, 0.0)                            # (rows, Wo*32)
        pooled = jnp.sum(s.reshape(rows // Ho, Ho, s.shape[1]), axis=1)   # (B, Wo*32)

        # fc1 + ReLU (DropBlock1D: identity in eval), fc2 padded to 128 lanes.
        h = jnp.maximum(
            jnp.dot(pooled, fw1_ref[...], preferred_element_type=f32) + f1b_ref[...],
            0.0)                                                # (B, 256)
        out_ref[...] = (jnp.dot(h, w2_ref[...], preferred_element_type=f32)
                        + f2b_ref[...]).astype(out_ref.dtype)   # (B, 128)

    in_specs = [pl.BlockSpec((rows, 4 * Wp), lambda i: (i, 0))]
    in_specs += [pl.BlockSpec(w.shape, lambda i: (0, 0)) for w in weights]

    out = pl.pallas_call(
        kernel,
        out_shape=jax.ShapeDtypeStruct((Npad, OUT_LANES), jnp.float32),
        grid=(Npad // B,),
        in_specs=in_specs,
        out_specs=pl.BlockSpec((B, OUT_LANES), lambda i: (i, 0)),
        compiler_params=pltpu.CompilerParams(
            dimension_semantics=("parallel",)),
    )(xg, *weights)
    return out[:N, :n_c]


# ----------------------------------------------------------------------------
# Parameters (PyTorch-default-like) and a pure-JAX reference for correctness
# ----------------------------------------------------------------------------

def init_params(key):
    ks = jax.random.split(key, 14)

    def rnd(k, shape, s=0.05):
        return jax.random.normal(k, shape, jnp.float32) * s

    p = {
        "conv1_w": rnd(ks[0], (16, 1, 3, 3)),
        "conv1_b": rnd(ks[1], (16,)),
        "dw_w":    rnd(ks[2], (16, 1, 3, 3)),
        "dw_b":    rnd(ks[3], (16,)),
        "pw_w":    rnd(ks[4], (32, 16, 1, 1)),
        "pw_b":    rnd(ks[5], (32,)),
        "res1_w":  rnd(ks[6], (32, 32, 3, 3)),
        "res1_b":  rnd(ks[7], (32,)),
        "res2_w":  rnd(ks[8], (32, 32, 3, 3)),
        "res2_b":  rnd(ks[9], (32,)),
        "fc1_w":   rnd(ks[10], (256, 32)),
        "fc1_b":   rnd(ks[11], (256,)),
        "fc2_w":   rnd(ks[12], (10, 256)),
        "fc2_b":   rnd(ks[13], (10,)),
    }
    for name, c in (("bn1", 16), ("rbn1", 32), ("rbn2", 32)):
        p[f"{name}_g"] = jnp.ones((c,), jnp.float32)
        p[f"{name}_b"] = jnp.zeros((c,), jnp.float32)
        p[f"{name}_m"] = jnp.zeros((c,), jnp.float32)
        p[f"{name}_v"] = jnp.ones((c,), jnp.float32)
    return p


def reference_forward(params, x_nchw):
    eps = 1e-5
    x = jnp.transpose(x_nchw, (0, 2, 3, 1)).astype(jnp.float32)

    def conv(x, w_oihw, b, stride, pad, groups=1):
        w_hwio = jnp.transpose(w_oihw, (2, 3, 1, 0))
        y = lax.conv_general_dilated(
            x, w_hwio, (stride, stride), ((pad, pad), (pad, pad)),
            dimension_numbers=("NHWC", "HWIO", "NHWC"),
            feature_group_count=groups)
        return y + b

    def bn(x, g, b, m, v):
        return (x - m) / jnp.sqrt(v + eps) * g + b

    y = jax.nn.relu(bn(conv(x, params["conv1_w"], params["conv1_b"], 1, 1),
                       params["bn1_g"], params["bn1_b"],
                       params["bn1_m"], params["bn1_v"]))
    y = conv(y, params["dw_w"], params["dw_b"], 2, 1, groups=16)
    y = conv(y, params["pw_w"], params["pw_b"], 1, 0)
    res = y
    z = jax.nn.relu(bn(conv(y, params["res1_w"], params["res1_b"], 1, 1),
                       params["rbn1_g"], params["rbn1_b"],
                       params["rbn1_m"], params["rbn1_v"]))
    z = bn(conv(z, params["res2_w"], params["res2_b"], 1, 1),
           params["rbn2_g"], params["rbn2_b"],
           params["rbn2_m"], params["rbn2_v"])
    z = jax.nn.relu(z + res)
    feat = z.mean(axis=(1, 2))
    h = jax.nn.relu(feat @ params["fc1_w"].T + params["fc1_b"])
    return h @ params["fc2_w"].T + params["fc2_b"]


# ----------------------------------------------------------------------------

if __name__ == "__main__":
    key = jax.random.PRNGKey(0)
    k_param, k_x = jax.random.split(key)
    params = init_params(k_param)

    # MNIST-like but small: batch=2, 1 channel, 16x16 spatial (NCHW).
    x = jax.random.normal(k_x, (2, 1, 16, 16), jnp.float32)

    packed = pack_operands(params, 16, 16)         # host-side, runs once
    fwd = jax.jit(lambda p, xx: model2_forward(p, xx, n_c=10))

    out = jax.block_until_ready(fwd(packed, x))
    assert out.shape == (2, 10), out.shape

    ref = jax.block_until_ready(reference_forward(params, x))
    assert jnp.allclose(out, ref, atol=2e-3, rtol=2e-3), (
        "mismatch vs reference", jnp.max(jnp.abs(out - ref)))

    print("KERNEL_OK")
</pallas_src>

<mosaic_0001>
module attributes {stable_mosaic.version = 11 : i64} {
  func.func @kernel(%arg0: i32, %arg1: memref<16x72xf32, #tpu.memory_space<vmem>>, %arg2: memref<72x512xf32, #tpu.memory_space<vmem>>, %arg3: memref<1x512xf32, #tpu.memory_space<vmem>>, %arg4: memref<768x256xf32, #tpu.memory_space<vmem>>, %arg5: memref<1x256xf32, #tpu.memory_space<vmem>>, %arg6: memref<768x256xf32, #tpu.memory_space<vmem>>, %arg7: memref<1x256xf32, #tpu.memory_space<vmem>>, %arg8: memref<768x256xf32, #tpu.memory_space<vmem>>, %arg9: memref<1x256xf32, #tpu.memory_space<vmem>>, %arg10: memref<256x256xf32, #tpu.memory_space<vmem>>, %arg11: memref<1x256xf32, #tpu.memory_space<vmem>>, %arg12: memref<256x128xf32, #tpu.memory_space<vmem>>, %arg13: memref<1x128xf32, #tpu.memory_space<vmem>>, %arg14: memref<2x128xf32, #tpu.memory_space<vmem>>) attributes {dimension_semantics = [#tpu.dimension_semantics<parallel>], iteration_bounds = array<i64: 1>, scalar_prefetch = 0 : i64, scratch_operands = 0 : i64, tpu.core_type = #tpu.core_type<tc>, window_params = [{transform_indices = @transform_0, window_bounds = array<i64: 16, 72>}, {pipeline_mode = #tpu.pipeline_mode<synchronous>, transform_indices = @transform_1, window_bounds = array<i64: 72, 512>}, {pipeline_mode = #tpu.pipeline_mode<synchronous>, transform_indices = @transform_2, window_bounds = array<i64: 1, 512>}, {pipeline_mode = #tpu.pipeline_mode<synchronous>, transform_indices = @transform_3, window_bounds = array<i64: 768, 256>}, {pipeline_mode = #tpu.pipeline_mode<synchronous>, transform_indices = @transform_4, window_bounds = array<i64: 1, 256>}, {pipeline_mode = #tpu.pipeline_mode<synchronous>, transform_indices = @transform_5, window_bounds = array<i64: 768, 256>}, {pipeline_mode = #tpu.pipeline_mode<synchronous>, transform_indices = @transform_6, window_bounds = array<i64: 1, 256>}, {pipeline_mode = #tpu.pipeline_mode<synchronous>, transform_indices = @transform_7, window_bounds = array<i64: 768, 256>}, {pipeline_mode = #tpu.pipeline_mode<synchronous>, transform_indices = @transform_8, window_bounds = array<i64: 1, 256>}, {pipeline_mode = #tpu.pipeline_mode<synchronous>, transform_indices = @transform_9, window_bounds = array<i64: 256, 256>}, {pipeline_mode = #tpu.pipeline_mode<synchronous>, transform_indices = @transform_10, window_bounds = array<i64: 1, 256>}, {pipeline_mode = #tpu.pipeline_mode<synchronous>, transform_indices = @transform_11, window_bounds = array<i64: 256, 128>}, {pipeline_mode = #tpu.pipeline_mode<synchronous>, transform_indices = @transform_12, window_bounds = array<i64: 1, 128>}, {transform_indices = @transform_13, window_bounds = array<i64: 2, 128>}]} {
    %0 = tpu.iota {dimensions = array<i32: 0>} : vector<16x1xi32>
    %c8_i32 = arith.constant 8 : i32
    %c0_i32 = arith.constant 0 : i32
    %1 = arith.cmpi eq, %c8_i32, %c0_i32 : i32
    %c1_i32 = arith.constant 1 : i32
    %2 = arith.select %1, %c1_i32, %c8_i32 : i32
    %3 = vector.broadcast %2 : i32 to vector<16x1xi32>
    %4 = arith.remsi %0, %3 : vector<16x1xi32>
    %c0_i32_0 = arith.constant 0 : i32
    %5 = vector.broadcast %c0_i32_0 : i32 to vector<16x1xi32>
    %6 = arith.cmpi ne, %4, %5 : vector<16x1xi32>
    %c0_i32_1 = arith.constant 0 : i32
    %7 = vector.broadcast %c0_i32_1 : i32 to vector<16x1xi32>
    %8 = arith.cmpi slt, %4, %7 : vector<16x1xi32>
    %c0_i32_2 = arith.constant 0 : i32
    %9 = arith.cmpi slt, %2, %c0_i32_2 : i32
    %10 = vector.broadcast %9 : i1 to vector<16x1xi1>
    %11 = vector.broadcast %10 : vector<16x1xi1> to vector<16x1xi1>
    %12 = arith.xori %8, %11 : vector<16x1xi1>
    %13 = arith.andi %12, %6 : vector<16x1xi1>
    %14 = vector.broadcast %2 : i32 to vector<16x1xi32>
    %15 = arith.addi %4, %14 : vector<16x1xi32>
    %16 = arith.select %13, %15, %4 : vector<16x1xi1>, vector<16x1xi32>
    %c0_i32_3 = arith.constant 0 : i32
    %17 = vector.broadcast %c0_i32_3 : i32 to vector<16x1xi32>
    %18 = arith.cmpi ne, %16, %17 : vector<16x1xi32>
    %c8_i32_4 = arith.constant 8 : i32
    %c0_i32_5 = arith.constant 0 : i32
    %19 = arith.cmpi eq, %c8_i32_4, %c0_i32_5 : i32
    %c1_i32_6 = arith.constant 1 : i32
    %20 = arith.select %19, %c1_i32_6, %c8_i32_4 : i32
    %21 = vector.broadcast %20 : i32 to vector<16x1xi32>
    %22 = arith.remsi %0, %21 : vector<16x1xi32>
    %c0_i32_7 = arith.constant 0 : i32
    %23 = vector.broadcast %c0_i32_7 : i32 to vector<16x1xi32>
    %24 = arith.cmpi ne, %22, %23 : vector<16x1xi32>
    %c0_i32_8 = arith.constant 0 : i32
    %25 = vector.broadcast %c0_i32_8 : i32 to vector<16x1xi32>
    %26 = arith.cmpi slt, %22, %25 : vector<16x1xi32>
    %c0_i32_9 = arith.constant 0 : i32
    %27 = arith.cmpi slt, %20, %c0_i32_9 : i32
    %28 = vector.broadcast %27 : i1 to vector<16x1xi1>
    %29 = vector.broadcast %28 : vector<16x1xi1> to vector<16x1xi1>
    %30 = arith.xori %26, %29 : vector<16x1xi1>
    %31 = arith.andi %30, %24 : vector<16x1xi1>
    %32 = vector.broadcast %20 : i32 to vector<16x1xi32>
    %33 = arith.addi %22, %32 : vector<16x1xi32>
    %34 = arith.select %31, %33, %22 : vector<16x1xi1>, vector<16x1xi32>
    %c7_i32 = arith.constant 7 : i32
    %35 = vector.broadcast %c7_i32 : i32 to vector<16x1xi32>
    %36 = arith.cmpi ne, %34, %35 : vector<16x1xi32>
    %c0 = arith.constant 0 : index
    %c0_10 = arith.constant 0 : index
    %37 = vector.load %arg1[%c0, %c0_10] : memref<16x72xf32, #tpu.memory_space<vmem>>, vector<16x72xf32>
    %c0_11 = arith.constant 0 : index
    %c0_12 = arith.constant 0 : index
    %38 = vector.load %arg2[%c0_11, %c0_12] : memref<72x512xf32, #tpu.memory_space<vmem>>, vector<72x512xf32>
    %cst = arith.constant dense<0.000000e+00> : vector<16x512xf32>
    %39 = tpu.matmul %37, %38, %cst {dimension_numbers = #tpu.dot_dimension_numbers<[1], [0], [0], [1], [0, 0, 1, 1], [], []>} : vector<16x72xf32>, vector<72x512xf32>, vector<16x512xf32> -> vector<16x512xf32>
    %c0_13 = arith.constant 0 : index
    %c0_14 = arith.constant 0 : index
    %40 = vector.load %arg3[%c0_13, %c0_14] : memref<1x512xf32, #tpu.memory_space<vmem>>, vector<1x512xf32>
    %41 = vector.broadcast %40 : vector<1x512xf32> to vector<16x512xf32>
    %42 = arith.addf %39, %41 : vector<16x512xf32>
    %cst_15 = arith.constant 0.000000e+00 : f32
    %43 = vector.broadcast %cst_15 : f32 to vector<16x512xf32>
    %44 = arith.maximumf %42, %43 : vector<16x512xf32>
    %45 = vector.extract_strided_slice %44 {offsets = [0, 256], sizes = [16, 256], strides = [1, 1]} : vector<16x512xf32> to vector<16x256xf32>
    %c1_i32_16 = arith.constant 1 : i32
    %46 = tpu.dynamic_rotate %45 by %c1_i32_16 dim 0 : vector<16x256xf32>, i32 -> vector<16x256xf32>
    %cst_17 = arith.constant 0.000000e+00 : f32
    %47 = vector.shape_cast %18 : vector<16x1xi1> to vector<16x1xi1>
    %48 = vector.broadcast %47 : vector<16x1xi1> to vector<16x256xi1>
    %49 = vector.broadcast %cst_17 : f32 to vector<16x256xf32>
    %50 = arith.select %48, %46, %49 : vector<16x256xi1>, vector<16x256xf32>
    %51 = tpu.concatenate %50, %44 in 1 : vector<16x256xf32>, vector<16x512xf32> -> vector<16x768xf32>
    %c0_18 = arith.constant 0 : index
    %c0_19 = arith.constant 0 : index
    %52 = vector.load %arg4[%c0_18, %c0_19] : memref<768x256xf32, #tpu.memory_space<vmem>>, vector<768x256xf32>
    %cst_20 = arith.constant dense<0.000000e+00> : vector<16x256xf32>
    %53 = tpu.matmul %51, %52, %cst_20 {dimension_numbers = #tpu.dot_dimension_numbers<[1], [0], [0], [1], [0, 0, 1, 1], [], []>} : vector<16x768xf32>, vector<768x256xf32>, vector<16x256xf32> -> vector<16x256xf32>
    %c0_21 = arith.constant 0 : index
    %c0_22 = arith.constant 0 : index
    %54 = vector.load %arg5[%c0_21, %c0_22] : memref<1x256xf32, #tpu.memory_space<vmem>>, vector<1x256xf32>
    %55 = vector.broadcast %54 : vector<1x256xf32> to vector<16x256xf32>
    %56 = arith.addf %53, %55 : vector<16x256xf32>
    %c1_i32_23 = arith.constant 1 : i32
    %57 = tpu.dynamic_rotate %56 by %c1_i32_23 dim 0 : vector<16x256xf32>, i32 -> vector<16x256xf32>
    %cst_24 = arith.constant 0.000000e+00 : f32
    %58 = vector.shape_cast %18 : vector<16x1xi1> to vector<16x1xi1>
    %59 = vector.broadcast %58 : vector<16x1xi1> to vector<16x256xi1>
    %60 = vector.broadcast %cst_24 : f32 to vector<16x256xf32>
    %61 = arith.select %59, %57, %60 : vector<16x256xi1>, vector<16x256xf32>
    %c15_i32 = arith.constant 15 : i32
    %62 = tpu.dynamic_rotate %56 by %c15_i32 dim 0 : vector<16x256xf32>, i32 -> vector<16x256xf32>
    %cst_25 = arith.constant 0.000000e+00 : f32
    %63 = vector.shape_cast %36 : vector<16x1xi1> to vector<16x1xi1>
    %64 = vector.broadcast %63 : vector<16x1xi1> to vector<16x256xi1>
    %65 = vector.broadcast %cst_25 : f32 to vector<16x256xf32>
    %66 = arith.select %64, %62, %65 : vector<16x256xi1>, vector<16x256xf32>
    %67 = tpu.concatenate %61, %56, %66 in 1 : vector<16x256xf32>, vector<16x256xf32>, vector<16x256xf32> -> vector<16x768xf32>
    %c0_26 = arith.constant 0 : index
    %c0_27 = arith.constant 0 : index
    %68 = vector.load %arg6[%c0_26, %c0_27] : memref<768x256xf32, #tpu.memory_space<vmem>>, vector<768x256xf32>
    %cst_28 = arith.constant dense<0.000000e+00> : vector<16x256xf32>
    %69 = tpu.matmul %67, %68, %cst_28 {dimension_numbers = #tpu.dot_dimension_numbers<[1], [0], [0], [1], [0, 0, 1, 1], [], []>} : vector<16x768xf32>, vector<768x256xf32>, vector<16x256xf32> -> vector<16x256xf32>
    %c0_29 = arith.constant 0 : index
    %c0_30 = arith.constant 0 : index
    %70 = vector.load %arg7[%c0_29, %c0_30] : memref<1x256xf32, #tpu.memory_space<vmem>>, vector<1x256xf32>
    %71 = vector.broadcast %70 : vector<1x256xf32> to vector<16x256xf32>
    %72 = arith.addf %69, %71 : vector<16x256xf32>
    %cst_31 = arith.constant 0.000000e+00 : f32
    %73 = vector.broadcast %cst_31 : f32 to vector<16x256xf32>
    %74 = arith.maximumf %72, %73 : vector<16x256xf32>
    %c1_i32_32 = arith.constant 1 : i32
    %75 = tpu.dynamic_rotate %74 by %c1_i32_32 dim 0 : vector<16x256xf32>, i32 -> vector<16x256xf32>
    %cst_33 = arith.constant 0.000000e+00 : f32
    %76 = vector.shape_cast %18 : vector<16x1xi1> to vector<16x1xi1>
    %77 = vector.broadcast %76 : vector<16x1xi1> to vector<16x256xi1>
    %78 = vector.broadcast %cst_33 : f32 to vector<16x256xf32>
    %79 = arith.select %77, %75, %78 : vector<16x256xi1>, vector<16x256xf32>
    %c15_i32_34 = arith.constant 15 : i32
    %80 = tpu.dynamic_rotate %74 by %c15_i32_34 dim 0 : vector<16x256xf32>, i32 -> vector<16x256xf32>
    %cst_35 = arith.constant 0.000000e+00 : f32
    %81 = vector.shape_cast %36 : vector<16x1xi1> to vector<16x1xi1>
    %82 = vector.broadcast %81 : vector<16x1xi1> to vector<16x256xi1>
    %83 = vector.broadcast %cst_35 : f32 to vector<16x256xf32>
    %84 = arith.select %82, %80, %83 : vector<16x256xi1>, vector<16x256xf32>
    %85 = tpu.concatenate %79, %74, %84 in 1 : vector<16x256xf32>, vector<16x256xf32>, vector<16x256xf32> -> vector<16x768xf32>
    %c0_36 = arith.constant 0 : index
    %c0_37 = arith.constant 0 : index
    %86 = vector.load %arg8[%c0_36, %c0_37] : memref<768x256xf32, #tpu.memory_space<vmem>>, vector<768x256xf32>
    %cst_38 = arith.constant dense<0.000000e+00> : vector<16x256xf32>
    %87 = tpu.matmul %85, %86, %cst_38 {dimension_numbers = #tpu.dot_dimension_numbers<[1], [0], [0], [1], [0, 0, 1, 1], [], []>} : vector<16x768xf32>, vector<768x256xf32>, vector<16x256xf32> -> vector<16x256xf32>
    %c0_39 = arith.constant 0 : index
    %c0_40 = arith.constant 0 : index
    %88 = vector.load %arg9[%c0_39, %c0_40] : memref<1x256xf32, #tpu.memory_space<vmem>>, vector<1x256xf32>
    %89 = vector.broadcast %88 : vector<1x256xf32> to vector<16x256xf32>
    %90 = arith.addf %87, %89 : vector<16x256xf32>
    %91 = arith.addf %90, %56 : vector<16x256xf32>
    %cst_41 = arith.constant 0.000000e+00 : f32
    %92 = vector.broadcast %cst_41 : f32 to vector<16x256xf32>
    %93 = arith.maximumf %91, %92 : vector<16x256xf32>
    %94 = vector.shape_cast %93 : vector<16x256xf32> to vector<2x8x256xf32>
    %cst_42 = arith.constant dense<0.000000e+00> : vector<2x256xf32>
    %95 = vector.multi_reduction <add>, %94, %cst_42 [1] : vector<2x8x256xf32> to vector<2x256xf32>
    %c0_43 = arith.constant 0 : index
    %c0_44 = arith.constant 0 : index
    %96 = vector.load %arg10[%c0_43, %c0_44] : memref<256x256xf32, #tpu.memory_space<vmem>>, vector<256x256xf32>
    %cst_45 = arith.constant dense<0.000000e+00> : vector<2x256xf32>
    %97 = tpu.matmul %95, %96, %cst_45 {dimension_numbers = #tpu.dot_dimension_numbers<[1], [0], [0], [1], [0, 0, 1, 1], [], []>} : vector<2x256xf32>, vector<256x256xf32>, vector<2x256xf32> -> vector<2x256xf32>
    %c0_46 = arith.constant 0 : index
    %c0_47 = arith.constant 0 : index
    %98 = vector.load %arg11[%c0_46, %c0_47] : memref<1x256xf32, #tpu.memory_space<vmem>>, vector<1x256xf32>
    %99 = vector.broadcast %98 : vector<1x256xf32> to vector<2x256xf32>
    %100 = arith.addf %97, %99 : vector<2x256xf32>
    %cst_48 = arith.constant 0.000000e+00 : f32
    %101 = vector.broadcast %cst_48 : f32 to vector<2x256xf32>
    %102 = arith.maximumf %100, %101 : vector<2x256xf32>
    %c0_49 = arith.constant 0 : index
    %c0_50 = arith.constant 0 : index
    %103 = vector.load %arg12[%c0_49, %c0_50] : memref<256x128xf32, #tpu.memory_space<vmem>>, vector<256x128xf32>
    %cst_51 = arith.constant dense<0.000000e+00> : vector<2x128xf32>
    %104 = tpu.matmul %102, %103, %cst_51 {dimension_numbers = #tpu.dot_dimension_numbers<[1], [0], [0], [1], [0, 0, 1, 1], [], []>} : vector<2x256xf32>, vector<256x128xf32>, vector<2x128xf32> -> vector<2x128xf32>
    %c0_52 = arith.constant 0 : index
    %c0_53 = arith.constant 0 : index
    %105 = vector.load %arg13[%c0_52, %c0_53] : memref<1x128xf32, #tpu.memory_space<vmem>>, vector<1x128xf32>
    %106 = vector.broadcast %105 : vector<1x128xf32> to vector<2x128xf32>
    %107 = arith.addf %104, %106 : vector<2x128xf32>
    %c0_54 = arith.constant 0 : index
    %c0_55 = arith.constant 0 : index
    %108 = vector.load %arg14[%c0_54, %c0_55] : memref<2x128xf32, #tpu.memory_space<vmem>>, vector<2x128xf32>
    tpu.vector_store %arg14[%c0_54, %c0_55], %107 {strides = array<i32>} : memref<2x128xf32, #tpu.memory_space<vmem>>, vector<2x128xf32>,
    return
  }
  func.func @transform_0(%arg0: i32) -> (i32, i32) {
    %c0_i32 = arith.constant 0 : i32
    %c0_i32_0 = arith.constant 0 : i32
    return %arg0, %c0_i32 : i32, i32
  }
  func.func @transform_1(%arg0: i32) -> (i32, i32) {
    %c0_i32 = arith.constant 0 : i32
    %c0_i32_0 = arith.constant 0 : i32
    %c0_i32_1 = arith.constant 0 : i32
    return %c0_i32, %c0_i32_0 : i32, i32
  }
  func.func @transform_2(%arg0: i32) -> (i32, i32) {
    %c0_i32 = arith.constant 0 : i32
    %c0_i32_0 = arith.constant 0 : i32
    %c0_i32_1 = arith.constant 0 : i32
    return %c0_i32, %c0_i32_0 : i32, i32
  }
  func.func @transform_3(%arg0: i32) -> (i32, i32) {
    %c0_i32 = arith.constant 0 : i32
    %c0_i32_0 = arith.constant 0 : i32
    %c0_i32_1 = arith.constant 0 : i32
    return %c0_i32, %c0_i32_0 : i32, i32
  }
  func.func @transform_4(%arg0: i32) -> (i32, i32) {
    %c0_i32 = arith.constant 0 : i32
    %c0_i32_0 = arith.constant 0 : i32
    %c0_i32_1 = arith.constant 0 : i32
    return %c0_i32, %c0_i32_0 : i32, i32
  }
  func.func @transform_5(%arg0: i32) -> (i32, i32) {
    %c0_i32 = arith.constant 0 : i32
    %c0_i32_0 = arith.constant 0 : i32
    %c0_i32_1 = arith.constant 0 : i32
    return %c0_i32, %c0_i32_0 : i32, i32
  }
  func.func @transform_6(%arg0: i32) -> (i32, i32) {
    %c0_i32 = arith.constant 0 : i32
    %c0_i32_0 = arith.constant 0 : i32
    %c0_i32_1 = arith.constant 0 : i32
    return %c0_i32, %c0_i32_0 : i32, i32
  }
  func.func @transform_7(%arg0: i32) -> (i32, i32) {
    %c0_i32 = arith.constant 0 : i32
    %c0_i32_0 = arith.constant 0 : i32
    %c0_i32_1 = arith.constant 0 : i32
    return %c0_i32, %c0_i32_0 : i32, i32
  }
  func.func @transform_8(%arg0: i32) -> (i32, i32) {
    %c0_i32 = arith.constant 0 : i32
    %c0_i32_0 = arith.constant 0 : i32
    %c0_i32_1 = arith.constant 0 : i32
    return %c0_i32, %c0_i32_0 : i32, i32
  }
  func.func @transform_9(%arg0: i32) -> (i32, i32) {
    %c0_i32 = arith.constant 0 : i32
    %c0_i32_0 = arith.constant 0 : i32
    %c0_i32_1 = arith.constant 0 : i32
    return %c0_i32, %c0_i32_0 : i32, i32
  }
  func.func @transform_10(%arg0: i32) -> (i32, i32) {
    %c0_i32 = arith.constant 0 : i32
    %c0_i32_0 = arith.constant 0 : i32
    %c0_i32_1 = arith.constant 0 : i32
    return %c0_i32, %c0_i32_0 : i32, i32
  }
  func.func @transform_11(%arg0: i32) -> (i32, i32) {
    %c0_i32 = arith.constant 0 : i32
    %c0_i32_0 = arith.constant 0 : i32
    %c0_i32_1 = arith.constant 0 : i32
    return %c0_i32, %c0_i32_0 : i32, i32
  }
  func.func @transform_12(%arg0: i32) -> (i32, i32) {
    %c0_i32 = arith.constant 0 : i32
    %c0_i32_0 = arith.constant 0 : i32
    %c0_i32_1 = arith.constant 0 : i32
    return %c0_i32, %c0_i32_0 : i32, i32
  }
  func.func @transform_13(%arg0: i32) -> (i32, i32) {
    %c0_i32 = arith.constant 0 : i32
    %c0_i32_0 = arith.constant 0 : i32
    return %arg0, %c0_i32 : i32, i32
  }
}

</mosaic_0001>

<llo_original>
// kernel: _lambda_.1
$region0: #{_lambda_.1}
  #allocation0 [shape = 'u32[]', space=smem, size = 0x4, offset = 0x4, fixed_abs, tag = 'smem constant byte address 0x4 - core index']
  #allocation1 [shape = 'u32[144,128]{1,0:T(1,128)}', space=vmem, size = 0x12000, scoped, tag = 'internal scratch']
  %s0 = inlined_call_operand.vmem [shape: f32[16,72], index: 0, kind: input, shape index: {}]
  %s1 = inlined_call_operand.hbm [shape: f32[72,512], index: 1, kind: input, shape index: {}]
  %s2 = inlined_call_operand.vmem [shape: f32[1,512], index: 2, kind: input, shape index: {}]
  %s3 = inlined_call_operand.hbm [shape: f32[768,256], index: 3, kind: input, shape index: {}]
  %s4 = inlined_call_operand.vmem [shape: f32[1,256], index: 4, kind: input, shape index: {}]
  %s5 = inlined_call_operand.hbm [shape: f32[768,256], index: 5, kind: input, shape index: {}]
  %s6 = inlined_call_operand.hbm [shape: f32[1,256], index: 6, kind: input, shape index: {}]
  %s7 = inlined_call_operand.hbm [shape: f32[768,256], index: 7, kind: input, shape index: {}]
  %s8 = inlined_call_operand.hbm [shape: f32[1,256], index: 8, kind: input, shape index: {}]
  %s9 = inlined_call_operand.vmem [shape: f32[256,256], index: 9, kind: input, shape index: {}]
  %s10 = inlined_call_operand.hbm [shape: f32[1,256], index: 10, kind: input, shape index: {}]
  %s11 = inlined_call_operand.hbm [shape: f32[256,128], index: 11, kind: input, shape index: {}]
  %s12 = inlined_call_operand.vmem [shape: f32[1,128], index: 12, kind: input, shape index: {}]
  %s13 = inlined_call_operand.hbm [shape: f32[2,128], index: 13, kind: output, shape index: {}]
  %s14 = sld [smem:[#allocation0]]
  $region94: #{_lambda_.1} parent=0
    _
  %s16 = ssub.s32 1, %s14
  %s17 = scalar_select 0, %s16, %s14
  $region1: #{_lambda_.1} parent=0
    #allocation2 [shape = 'u8[147456]{0}', space=vmem, size = 0x24000, scoped, tag = 'input window, operand 1, single buffered']
    #allocation3 [shape = 's32[1]{0}', space=sflag, size = 0x4, scoped, tag = 'scoped memory for _lambda_.1']
    #allocation4 [shape = 's32[1]{0}', space=sflag, size = 0x4, scoped, tag = 'scoped memory for _lambda_.1']
    #allocation5 [shape = 'u8[786432]{0}', space=vmem, size = 0xc0000, scoped, tag = 'input window, operand 3, single buffered']
    #allocation6 [shape = 's32[1]{0}', space=sflag, size = 0x4, scoped, tag = 'scoped memory for _lambda_.1']
    #allocation7 [shape = 'u8[786432]{0}', space=vmem, size = 0xc0000, scoped, tag = 'input window, operand 5, single buffered']
    #allocation8 [shape = 'u8[1024]{0}', space=vmem, size = 0x400, scoped, tag = 'input window, operand 6, single buffered']
    #allocation9 [shape = 's32[1]{0}', space=sflag, size = 0x4, scoped, tag = 'scoped memory for _lambda_.1']
    #allocation10 [shape = 'u8[786432]{0}', space=vmem, size = 0xc0000, scoped, tag = 'input window, operand 7, single buffered']
    #allocation11 [shape = 'u8[1024]{0}', space=vmem, size = 0x400, scoped, tag = 'input window, operand 8, single buffered']
    #allocation12 [shape = 's32[1]{0}', space=sflag, size = 0x4, scoped, tag = 'scoped memory for _lambda_.1']
    #allocation13 [shape = 'u8[1024]{0}', space=vmem, size = 0x400, scoped, tag = 'input window, operand 10, single buffered']
    #allocation14 [shape = 'u8[131072]{0}', space=vmem, size = 0x20000, scoped, tag = 'input window, operand 11, single buffered']
    #allocation15 [shape = 's32[1]{0}', space=sflag, size = 0x4, scoped, tag = 'scoped memory for _lambda_.1']
    #allocation16 [shape = 'u8[1024]{0}', space=vmem, size = 0x400, scoped, tag = 'output window, operand 0, single buffered']
    %18 = vsyncpa [#allocation3], 0
    %19 = vsyncpa [#allocation6], 0
    %20 = vsyncpa [#allocation9], 0
    %21 = vsyncpa [#allocation12], 0
    %22 = vsyncpa [#allocation15], 0
    %23 = vsyncpa [#allocation4], 0
    // Predicated region
    $region2: #{_lambda_.1} parent=1 // pred_check
      _
    $region3: #{_lambda_.1} parent=1 // pred_check_branch
      %25 = sbr.rel (0) target = $region5
    $region4: #{_lambda_.1} parent=1 // pred_region
      _
    $region5: #{_lambda_.1} parent=1 // pred_fallthru
      _
    // Predicated region
    $region6: #{_lambda_.1} parent=1 // pred_check
      _
    $region7: #{_lambda_.1} parent=1 // pred_check_branch
      %27 = sbr.rel (0) target = $region9
    $region8: #{_lambda_.1} parent=1 // pred_region
      %s29 = ssub.s32 4608, 4608
      %30 = vsyncadd [#allocation3], %s29
      %s31 = sshll.u32 [#allocation2], 4
      %s32 = int_to_ptr.vmem [resolvable:$true] %s31
      %37 = dma.hbm_to_vmem [thread:$0]  %s1, 4608, %s32, [#allocation3], 512, 512, 32
    $region9: #{_lambda_.1} parent=1 // pred_fallthru
      _
    // Predicated region
    $region10: #{_lambda_.1} parent=1 // pred_check
      _
    $region11: #{_lambda_.1} parent=1 // pred_check_branch
      %39 = sbr.rel (0) target = $region13
    $region12: #{_lambda_.1} parent=1 // pred_region
      _
    $region13: #{_lambda_.1} parent=1 // pred_fallthru
      _
    // Predicated region
    $region14: #{_lambda_.1} parent=1 // pred_check
      _
    $region15: #{_lambda_.1} parent=1 // pred_check_branch
      %41 = sbr.rel (0) target = $region17
    $region16: #{_lambda_.1} parent=1 // pred_region
      %s43 = ssub.s32 24576, 24576
      %44 = vsyncadd [#allocation6], %s43
      %s45 = sshll.u32 [#allocation5], 4
      %s46 = int_to_ptr.vmem [resolvable:$true] %s45
      %51 = dma.hbm_to_vmem [thread:$0]  %s3, 24576, %s46, [#allocation6], 256, 256, 16
    $region17: #{_lambda_.1} parent=1 // pred_fallthru
      _
    // Predicated region
    $region18: #{_lambda_.1} parent=1 // pred_check
      _
    $region19: #{_lambda_.1} parent=1 // pred_check_branch
      %53 = sbr.rel (0) target = $region21
    $region20: #{_lambda_.1} parent=1 // pred_region
      _
    $region21: #{_lambda_.1} parent=1 // pred_fallthru
      _
    // Predicated region
    $region22: #{_lambda_.1} parent=1 // pred_check
      _
    $region23: #{_lambda_.1} parent=1 // pred_check_branch
      %55 = sbr.rel (0) target = $region25
    $region24: #{_lambda_.1} parent=1 // pred_region
      %s57 = ssub.s32 24576, 24576
      %58 = vsyncadd [#allocation6], %s57
      %s59 = sshll.u32 [#allocation7], 4
      %s60 = int_to_ptr.vmem [resolvable:$true] %s59
      %65 = dma.hbm_to_vmem [thread:$0]  %s5, 24576, %s60, [#allocation6], 256, 256, 16
    $region25: #{_lambda_.1} parent=1 // pred_fallthru
      _
    // Predicated region
    $region26: #{_lambda_.1} parent=1 // pred_check
      _
    $region27: #{_lambda_.1} parent=1 // pred_check_branch
      %67 = sbr.rel (0) target = $region29
    $region28: #{_lambda_.1} parent=1 // pred_region
      %s69 = ssub.s32 32, 32
      %70 = vsyncadd [#allocation9], %s69
      %s72 = sshll.u32 [#allocation8], 4
      %s73 = int_to_ptr.vmem [resolvable:$true] %s72
      %75 = dma.hbm_to_vmem [thread:$0]  %s6, 32, %s73, [#allocation9]
    $region29: #{_lambda_.1} parent=1 // pred_fallthru
      _
    // Predicated region
    $region30: #{_lambda_.1} parent=1 // pred_check
      _
    $region31: #{_lambda_.1} parent=1 // pred_check_branch
      %77 = sbr.rel (0) target = $region33
    $region32: #{_lambda_.1} parent=1 // pred_region
      %s79 = ssub.s32 24576, 24576
      %80 = vsyncadd [#allocation9], %s79
      %s81 = sshll.u32 [#allocation10], 4
      %s82 = int_to_ptr.vmem [resolvable:$true] %s81
      %87 = dma.hbm_to_vmem [thread:$0]  %s7, 24576, %s82, [#allocation9], 256, 256, 16
    $region33: #{_lambda_.1} parent=1 // pred_fallthru
      _
    // Predicated region
    $region34: #{_lambda_.1} parent=1 // pred_check
      _
    $region35: #{_lambda_.1} parent=1 // pred_check_branch
      %89 = sbr.rel (0) target = $region37
    $region36: #{_lambda_.1} parent=1 // pred_region
      %s91 = ssub.s32 32, 32
      %92 = vsyncadd [#allocation12], %s91
      %s94 = sshll.u32 [#allocation11], 4
      %s95 = int_to_ptr.vmem [resolvable:$true] %s94
      %97 = dma.hbm_to_vmem [thread:$0]  %s8, 32, %s95, [#allocation12]
    $region37: #{_lambda_.1} parent=1 // pred_fallthru
      _
    // Predicated region
    $region38: #{_lambda_.1} parent=1 // pred_check
      _
    $region39: #{_lambda_.1} parent=1 // pred_check_branch
      %99 = sbr.rel (0) target = $region41
    $region40: #{_lambda_.1} parent=1 // pred_region
      _
    $region41: #{_lambda_.1} parent=1 // pred_fallthru
      _
    // Predicated region
    $region42: #{_lambda_.1} parent=1 // pred_check
      _
    $region43: #{_lambda_.1} parent=1 // pred_check_branch
      %101 = sbr.rel (0) target = $region45
    $region44: #{_lambda_.1} parent=1 // pred_region
      %s103 = ssub.s32 32, 32
      %104 = vsyncadd [#allocation12], %s103
      %s106 = sshll.u32 [#allocation13], 4
      %s107 = int_to_ptr.vmem [resolvable:$true] %s106
      %109 = dma.hbm_to_vmem [thread:$0]  %s10, 32, %s107, [#allocation12]
    $region45: #{_lambda_.1} parent=1 // pred_fallthru
      _
    // Predicated region
    $region46: #{_lambda_.1} parent=1 // pred_check
      _
    $region47: #{_lambda_.1} parent=1 // pred_check_branch
      %111 = sbr.rel (0) target = $region49
    $region48: #{_lambda_.1} parent=1 // pred_region
      %s113 = ssub.s32 4096, 4096
      %114 = vsyncadd [#allocation15], %s113
      %s115 = sshll.u32 [#allocation14], 4
      %s116 = int_to_ptr.vmem [resolvable:$true] %s115
      %121 = dma.hbm_to_vmem [thread:$0]  %s11, 4096, %s116, [#allocation15], 128, 128, 8
    $region49: #{_lambda_.1} parent=1 // pred_fallthru
      _
    // Predicated region
    $region50: #{_lambda_.1} parent=1 // pred_check
      _
    $region51: #{_lambda_.1} parent=1 // pred_check_branch
      %123 = sbr.rel (0) target = $region53
    $region52: #{_lambda_.1} parent=1 // pred_region
      _
    $region53: #{_lambda_.1} parent=1 // pred_fallthru
      _
    // Predicated region
    $region54: #{_lambda_.1} parent=1 // pred_check
      _
    $region55: #{_lambda_.1} parent=1 // pred_check_branch
      %125 = sbr.rel (0) target = $region57
    $region56: #{_lambda_.1} parent=1 // pred_region
      %126 = dma.done [#allocation3], 4608
    $region57: #{_lambda_.1} parent=1 // pred_fallthru
      _
    // Predicated region
    $region58: #{_lambda_.1} parent=1 // pred_check
      _
    $region59: #{_lambda_.1} parent=1 // pred_check_branch
      %128 = sbr.rel (0) target = $region61
    $region60: #{_lambda_.1} parent=1 // pred_region
      %129 = dma.done [#allocation6], 24576
    $region61: #{_lambda_.1} parent=1 // pred_fallthru
      _
    // Predicated region
    $region62: #{_lambda_.1} parent=1 // pred_check
      _
    $region63: #{_lambda_.1} parent=1 // pred_check_branch
      %131 = sbr.rel (0) target = $region65
    $region64: #{_lambda_.1} parent=1 // pred_region
      %132 = dma.done [#allocation6], 24576
    $region65: #{_lambda_.1} parent=1 // pred_fallthru
      _
    // Predicated region
    $region66: #{_lambda_.1} parent=1 // pred_check
      _
    $region67: #{_lambda_.1} parent=1 // pred_check_branch
      %134 = sbr.rel (0) target = $region69
    $region68: #{_lambda_.1} parent=1 // pred_region
      %135 = dma.done [#allocation9], 32
    $region69: #{_lambda_.1} parent=1 // pred_fallthru
      _
    // Predicated region
    $region70: #{_lambda_.1} parent=1 // pred_check
      _
    $region71: #{_lambda_.1} parent=1 // pred_check_branch
      %137 = sbr.rel (0) target = $region73
    $region72: #{_lambda_.1} parent=1 // pred_region
      %138 = dma.done [#allocation9], 24576
    $region73: #{_lambda_.1} parent=1 // pred_fallthru
      _
    // Predicated region
    $region74: #{_lambda_.1} parent=1 // pred_check
      _
    $region75: #{_lambda_.1} parent=1 // pred_check_branch
      %140 = sbr.rel (0) target = $region77
    $region76: #{_lambda_.1} parent=1 // pred_region
      %141 = dma.done [#allocation12], 32
    $region77: #{_lambda_.1} parent=1 // pred_fallthru
      _
    // Predicated region
    $region78: #{_lambda_.1} parent=1 // pred_check
      _
    $region79: #{_lambda_.1} parent=1 // pred_check_branch
      %143 = sbr.rel (0) target = $region81
    $region80: #{_lambda_.1} parent=1 // pred_region
      %144 = dma.done [#allocation12], 32
    $region81: #{_lambda_.1} parent=1 // pred_fallthru
      _
    // Predicated region
    $region82: #{_lambda_.1} parent=1 // pred_check
      _
    $region83: #{_lambda_.1} parent=1 // pred_check_branch
      %146 = sbr.rel (0) target = $region85
    $region84: #{_lambda_.1} parent=1 // pred_region
      %147 = dma.done [#allocation15], 4096
    $region85: #{_lambda_.1} parent=1 // pred_fallthru
      _
    %v148 = vlaneseq
    %v149 = vshrl.u32 %v148, 7
    %v150 = vadd.s32 %v149, 8
    %vm151 = vcmp.lt.s32.totalorder %v149, 0
    %v152 = vsub.s32 0, %v149
    %v153 = vsel %vm151, %v152, %v149
    %v154 = vshrl.u32 %v153, 3
    %v155 = vand.u32 %v153, 7
    %v156 = vsub.s32 0, %v155
    %v157 = vsel %vm151, %v156, %v155
    %vm158 = vcmp.lt.s32.totalorder %v150, 0
    %v159 = vsub.s32 0, %v150
    %v160 = vsel %vm158, %v159, %v150
    %v161 = vshrl.u32 %v160, 3
    %v162 = vand.u32 %v160, 7
    %v163 = vsub.s32 0, %v162
    %v164 = vsel %vm158, %v163, %v162
    %vm165 = vcmp.ne.s32.totalorder %v157, 0
    %vm166 = vcmp.ne.s32.totalorder %v164, 0
    %vm167 = vcmp.lt.s32.totalorder %v157, 0
    %vm168 = vcmp.lt.s32.totalorder %v164, 0
    %vm169 = vmand %vm167, %vm165
    %vm170 = vmand %vm168, %vm166
    %v171 = vadd.s32 %v157, 8
    %v172 = vadd.s32 %v164, 8
    %v173 = vsel %vm169, %v171, %v157
    %v174 = vsel %vm170, %v172, %v164
    %vm175 = vcmp.ne.s32.totalorder %v173, 0
    %vm176 = vcmp.ne.s32.totalorder %v174, 0
    %vm177 = vcmp.ne.s32.totalorder %v173, 7
    %vm178 = vcmp.ne.s32.totalorder %v174, 7
    %v179 = vld [vmem:[%s0] sm:$0xff]
    %v180 = vld [vmem:[%s0 + $0x8] sm:$0xff]
    %v181 = vld [vmem:[#allocation2] sm:$0xff]
    %v182 = vld [vmem:[#allocation2 + $0x8] sm:$0xff]
    %v183 = vld [vmem:[#allocation2 + $0x10] sm:$0xff]
    %v184 = vld [vmem:[#allocation2 + $0x18] sm:$0xff]
    %v185 = vld [vmem:[#allocation2 + $0x20] sm:$0xff]
    %v186 = vld [vmem:[#allocation2 + $0x28] sm:$0xff]
    %v187 = vld [vmem:[#allocation2 + $0x30] sm:$0xff]
    %v188 = vld [vmem:[#allocation2 + $0x38] sm:$0xff]
    %v189 = vld [vmem:[#allocation2 + $0x40] sm:$0xff]
    %v190 = vld [vmem:[#allocation2 + $0x48] sm:$0xff]
    %v191 = vld [vmem:[#allocation2 + $0x50] sm:$0xff]
    %v192 = vld [vmem:[#allocation2 + $0x58] sm:$0xff]
    %v193 = vld [vmem:[#allocation2 + $0x60] sm:$0xff]
    %v194 = vld [vmem:[#allocation2 + $0x68] sm:$0xff]
    %v195 = vld [vmem:[#allocation2 + $0x70] sm:$0xff]
    %v196 = vld [vmem:[#allocation2 + $0x78] sm:$0xff]
    %v197 = vld [vmem:[#allocation2 + $0x80] sm:$0xff]
    %v198 = vld [vmem:[#allocation2 + $0x88] sm:$0xff]
    %v199 = vld [vmem:[#allocation2 + $0x90] sm:$0xff]
    %v200 = vld [vmem:[#allocation2 + $0x98] sm:$0xff]
    %v201 = vld [vmem:[#allocation2 + $0xa0] sm:$0xff]
    %v202 = vld [vmem:[#allocation2 + $0xa8] sm:$0xff]
    %v203 = vld [vmem:[#allocation2 + $0xb0] sm:$0xff]
    %v204 = vld [vmem:[#allocation2 + $0xb8] sm:$0xff]
    %v205 = vld [vmem:[#allocation2 + $0xc0] sm:$0xff]
    %v206 = vld [vmem:[#allocation2 + $0xc8] sm:$0xff]
    %v207 = vld [vmem:[#allocation2 + $0xd0] sm:$0xff]
    %v208 = vld [vmem:[#allocation2 + $0xd8] sm:$0xff]
    %v209 = vld [vmem:[#allocation2 + $0xe0] sm:$0xff]
    %v210 = vld [vmem:[#allocation2 + $0xe8] sm:$0xff]
    %v211 = vld [vmem:[#allocation2 + $0xf0] sm:$0xff]
    %v212 = vld [vmem:[#allocation2 + $0xf8] sm:$0xff]
    %v213 = vld [vmem:[#allocation2 + $0x100] sm:$0xff]
    %v214 = vld [vmem:[#allocation2 + $0x108] sm:$0xff]
    %v215 = vld [vmem:[#allocation2 + $0x110] sm:$0xff]
    %v216 = vld [vmem:[#allocation2 + $0x118] sm:$0xff]
    %v217 = vld [vmem:[%s2] sm:$0xf]
    %v219 = vlaneseq
    %v220 = vshrl.u32 %v219, 7
    %v221 = vsub.s32 0, %v220
    %v222 = vrot.slane %v217, %v221
    %v223 = vlaneseq
    %v224 = vshrl.u32 %v223, 7
    %v225 = vsub.s32 1, %v224
    %v226 = vrot.slane %v217, %v225
    %v227 = vlaneseq
    %v228 = vshrl.u32 %v227, 7
    %v229 = vsub.s32 2, %v228
    %v230 = vrot.slane %v217, %v229
    %v231 = vlaneseq
    %v232 = vshrl.u32 %v231, 7
    %v233 = vsub.s32 3, %v232
    %v234 = vrot.slane %v217, %v233
    %vm239 = vcmask 588800
    %v241 = vsel %vm239, %v179, 0
    %v244 = vsel %vm239, %v180, 0
    %246 = vmatprep.subr.mxu0 0.0
    %247 = vmatpush1.msra.mxu0 0.0
    %248 = vmatprep.subr.mxu0 0.0
    %249 = vmatpush1.msra.mxu0 0.0
    %250 = vmatprep.subr.mxu0 0.0
    %251 = vmatpush1.msra.mxu0 0.0
    %252 = vmatprep.subr.mxu0 0.0
    %253 = vmatpush1.msra.mxu0 0.0
    %254 = vmatprep.subr.mxu0 0.0
    %255 = vmatpush1.msra.mxu0 0.0
    %256 = vmatprep.subr.mxu0 0.0
    %257 = vmatpush1.msra.mxu0 0.0
    %258 = vmatprep.subr.mxu0 0.0
    %259 = vmatpush1.msra.mxu0 0.0
    %260 = vmatprep.subr.mxu0 %v214
    %261 = vmatpush1.msra.mxu0 %v213
    %262 = vmatprep.subr.mxu0 %v210
    %263 = vmatpush1.msra.mxu0 %v209
    %264 = vmatprep.subr.mxu0 %v206
    %265 = vmatpush1.msra.mxu0 %v205
    %266 = vmatprep.subr.mxu0 %v202
    %267 = vmatpush1.msra.mxu0 %v201
    %268 = vmatprep.subr.mxu0 %v198
    %269 = vmatpush1.msra.mxu0 %v197
    %270 = vmatprep.subr.mxu0 %v194
    %271 = vmatpush1.msra.mxu0 %v193
    %272 = vmatprep.subr.mxu0 %v190
    %273 = vmatpush1.msra.mxu0 %v189
    %274 = vmatprep.subr.mxu0 %v186
    %275 = vmatpush1.msra.mxu0 %v185
    %276 = vmatprep.subr.mxu0 %v182
    %277 = vmatpush1.msra.mxu0 %v181
    %278 = vmatprep.subr.mxu0 0.0
    %279 = vmatpush2.msra.mxu0 0.0
    %280 = vmatprep.subr.mxu0 0.0
    %281 = vmatpush2.msra.mxu0 0.0
    %282 = vmatprep.subr.mxu0 0.0
    %283 = vmatpush2.msra.mxu0 0.0
    %284 = vmatprep.subr.mxu0 0.0
    %285 = vmatpush2.msra.mxu0 0.0
    %286 = vmatprep.subr.mxu0 0.0
    %287 = vmatpush2.msra.mxu0 0.0
    %288 = vmatprep.subr.mxu0 0.0
    %289 = vmatpush2.msra.mxu0 0.0
    %290 = vmatprep.subr.mxu0 0.0
    %291 = vmatpush2.msra.mxu0 0.0
    %292 = vmatprep.subr.mxu0 0.0
    %293 = vmatpush2.msra.mxu0 0.0
    %294 = vmatprep.subr.mxu0 0.0
    %295 = vmatpush2.msra.mxu0 0.0
    %296 = vmatprep.subr.mxu0 0.0
    %297 = vmatpush2.msra.mxu0 0.0
    %298 = vmatprep.subr.mxu0 0.0
    %299 = vmatpush2.msra.mxu0 0.0
    %300 = vmatprep.subr.mxu0 0.0
    %301 = vmatpush2.msra.mxu0 0.0
    %302 = vmatprep.subr.mxu0 0.0
    %303 = vmatpush2.msra.mxu0 0.0
    %304 = vmatprep.subr.mxu0 0.0
    %305 = vmatpush2.msra.mxu0 0.0
    %306 = vmatprep.subr.mxu0 0.0
    %307 = vmatpush2.msra.mxu0 0.0
    %308 = vmatprep.subr.mxu0 0.0
    %309 = vmatpush2.msra.mxu0 0.0
    %310 = vmatprep.mubr.f32.mxu0 0.0
    %311 = vmatmul.mubr.f32.gmra.mxu0 %v241
    %v312 = vpop.f32.mrf.mxu0
    %v313 = vadd.f32 %v222, %v312
    %v314 = vpop.f32.mrf.mxu0
    %v315 = vadd.f32 %v226, %v314
    %316 = vmatprep.mubr.f32.mxu0 0.0
    %317 = vmatmul.mubr.f32.gmra.mxu0 %v244
    %v318 = vpop.f32.mrf.mxu0
    %v319 = vadd.f32 %v222, %v318
    %v320 = vpop.f32.mrf.mxu0
    %v321 = vadd.f32 %v226, %v320
    %322 = vdwg.mxu0
    %323 = vmatprep.subr.mxu0 0.0
    %324 = vmatpush1.msra.mxu0 0.0
    %325 = vmatprep.subr.mxu0 0.0
    %326 = vmatpush1.msra.mxu0 0.0
    %327 = vmatprep.subr.mxu0 0.0
    %328 = vmatpush1.msra.mxu0 0.0
    %329 = vmatprep.subr.mxu0 0.0
    %330 = vmatpush1.msra.mxu0 0.0
    %331 = vmatprep.subr.mxu0 0.0
    %332 = vmatpush1.msra.mxu0 0.0
    %333 = vmatprep.subr.mxu0 0.0
    %334 = vmatpush1.msra.mxu0 0.0
    %335 = vmatprep.subr.mxu0 0.0
    %336 = vmatpush1.msra.mxu0 0.0
    %337 = vmatprep.subr.mxu0 %v216
    %338 = vmatpush1.msra.mxu0 %v215
    %339 = vmatprep.subr.mxu0 %v212
    %340 = vmatpush1.msra.mxu0 %v211
    %341 = vmatprep.subr.mxu0 %v208
    %342 = vmatpush1.msra.mxu0 %v207
    %343 = vmatprep.subr.mxu0 %v204
    %344 = vmatpush1.msra.mxu0 %v203
    %345 = vmatprep.subr.mxu0 %v200
    %346 = vmatpush1.msra.mxu0 %v199
    %347 = vmatprep.subr.mxu0 %v196
    %348 = vmatpush1.msra.mxu0 %v195
    %349 = vmatprep.subr.mxu0 %v192
    %350 = vmatpush1.msra.mxu0 %v191
    %351 = vmatprep.subr.mxu0 %v188
    %352 = vmatpush1.msra.mxu0 %v187
    %353 = vmatprep.subr.mxu0 %v184
    %354 = vmatpush1.msra.mxu0 %v183
    %355 = vmatprep.subr.mxu0 0.0
    %356 = vmatpush2.msra.mxu0 0.0
    %357 = vmatprep.subr.mxu0 0.0
    %358 = vmatpush2.msra.mxu0 0.0
    %359 = vmatprep.subr.mxu0 0.0
    %360 = vmatpush2.msra.mxu0 0.0
    %361 = vmatprep.subr.mxu0 0.0
    %362 = vmatpush2.msra.mxu0 0.0
    %363 = vmatprep.subr.mxu0 0.0
    %364 = vmatpush2.msra.mxu0 0.0
    %365 = vmatprep.subr.mxu0 0.0
    %366 = vmatpush2.msra.mxu0 0.0
    %367 = vmatprep.subr.mxu0 0.0
    %368 = vmatpush2.msra.mxu0 0.0
    %369 = vmatprep.subr.mxu0 0.0
    %370 = vmatpush2.msra.mxu0 0.0
    %371 = vmatprep.subr.mxu0 0.0
    %372 = vmatpush2.msra.mxu0 0.0
    %373 = vmatprep.subr.mxu0 0.0
    %374 = vmatpush2.msra.mxu0 0.0
    %375 = vmatprep.subr.mxu0 0.0
    %376 = vmatpush2.msra.mxu0 0.0
    %377 = vmatprep.subr.mxu0 0.0
    %378 = vmatpush2.msra.mxu0 0.0
    %379 = vmatprep.subr.mxu0 0.0
    %380 = vmatpush2.msra.mxu0 0.0
    %381 = vmatprep.subr.mxu0 0.0
    %382 = vmatpush2.msra.mxu0 0.0
    %383 = vmatprep.subr.mxu0 0.0
    %384 = vmatpush2.msra.mxu0 0.0
    %385 = vmatprep.subr.mxu0 0.0
    %386 = vmatpush2.msra.mxu0 0.0
    %387 = vmatprep.mubr.f32.mxu0 0.0
    %388 = vmatmul.mubr.f32.gmra.mxu0 %v241
    %v389 = vpop.f32.mrf.mxu0
    %v390 = vadd.f32 %v230, %v389
    %v391 = vpop.f32.mrf.mxu0
    %v392 = vadd.f32 %v234, %v391
    %393 = vmatprep.mubr.f32.mxu0 0.0
    %394 = vmatmul.mubr.f32.gmra.mxu0 %v244
    %v395 = vpop.f32.mrf.mxu0
    %v396 = vadd.f32 %v230, %v395
    %v397 = vpop.f32.mrf.mxu0
    %v398 = vadd.f32 %v234, %v397
    %399 = vdwg.mxu0
    %v400 = vmax.f32 %v313, 0.0
    %v401 = vmax.f32 %v315, 0.0
    %v402 = vmax.f32 %v390, 0.0
    %v403 = vmax.f32 %v392, 0.0
    %v404 = vmax.f32 %v319, 0.0
    %v405 = vmax.f32 %v321, 0.0
    %v406 = vmax.f32 %v396, 0.0
    %v407 = vmax.f32 %v398, 0.0
    %v408 = vrot.slane %v402, 7
    %v409 = vrot.slane %v403, 7
    %v410 = vrot.slane %v406, 7
    %v411 = vrot.slane %v407, 7
    %vm412 = vcmp.lt.s32.totalorder %v149, 1
    %v413 = vsel %vm412, %v408, %v410
    %v414 = vsel %vm412, %v409, %v411
    %v415 = vsel %vm412, %v410, %v408
    %v416 = vsel %vm412, %v411, %v409
    %v417 = vsel %vm175, 1, 0
    %v418 = vsel %vm176, 1, 0
    %vm419 = vcmp.eq.s32.totalorder %v417, 1
    %vm420 = vcmp.eq.s32.totalorder %v418, 1
    %v421 = vsel %vm419, %v415, 0.0
    %v422 = vsel %vm419, %v416, 0.0
    %v423 = vsel %vm420, %v413, 0.0
    %v424 = vsel %vm420, %v414, 0.0
    %v425 = vld [vmem:[#allocation5] sm:$0xff]
    %v426 = vld [vmem:[#allocation5 + $0x8] sm:$0xff]
    %v427 = vld [vmem:[#allocation5 + $0x10] sm:$0xff]
    %v428 = vld [vmem:[#allocation5 + $0x18] sm:$0xff]
    %v429 = vld [vmem:[#allocation5 + $0x20] sm:$0xff]
    %v430 = vld [vmem:[#allocation5 + $0x28] sm:$0xff]
    %v431 = vld [vmem:[#allocation5 + $0x30] sm:$0xff]
    %v432 = vld [vmem:[#allocation5 + $0x38] sm:$0xff]
    %v433 = vld [vmem:[#allocation5 + $0x40] sm:$0xff]
    %v434 = vld [vmem:[#allocation5 + $0x48] sm:$0xff]
    %v435 = vld [vmem:[#allocation5 + $0x50] sm:$0xff]
    %v436 = vld [vmem:[#allocation5 + $0x58] sm:$0xff]
    %v437 = vld [vmem:[#allocation5 + $0x60] sm:$0xff]
    %v438 = vld [vmem:[#allocation5 + $0x68] sm:$0xff]
    %v439 = vld [vmem:[#allocation5 + $0x70] sm:$0xff]
    %v440 = vld [vmem:[#allocation5 + $0x78] sm:$0xff]
    %v441 = vld [vmem:[#allocation5 + $0x80] sm:$0xff]
    %v442 = vld [vmem:[#allocation5 + $0x88] sm:$0xff]
    %v443 = vld [vmem:[#allocation5 + $0x90] sm:$0xff]
    %v444 = vld [vmem:[#allocation5 + $0x98] sm:$0xff]
    %v445 = vld [vmem:[#allocation5 + $0xa0] sm:$0xff]
    %v446 = vld [vmem:[#allocation5 + $0xa8] sm:$0xff]
    %v447 = vld [vmem:[#allocation5 + $0xb0] sm:$0xff]
    %v448 = vld [vmem:[#allocation5 + $0xb8] sm:$0xff]
    %v449 = vld [vmem:[#allocation5 + $0xc0] sm:$0xff]
    %v450 = vld [vmem:[#allocation5 + $0xc8] sm:$0xff]
    %v451 = vld [vmem:[#allocation5 + $0xd0] sm:$0xff]
    %v452 = vld [vmem:[#allocation5 + $0xd8] sm:$0xff]
    %v453 = vld [vmem:[#allocation5 + $0xe0] sm:$0xff]
    %v454 = vld [vmem:[#allocation5 + $0xe8] sm:$0xff]
    %v455 = vld [vmem:[#allocation5 + $0xf0] sm:$0xff]
    %v456 = vld [vmem:[#allocation5 + $0xf8] sm:$0xff]
    %v457 = vld [vmem:[#allocation5 + $0x100] sm:$0xff]
    %v458 = vld [vmem:[#allocation5 + $0x108] sm:$0xff]
    %v459 = vld [vmem:[#allocation5 + $0x110] sm:$0xff]
    %v460 = vld [vmem:[#allocation5 + $0x118] sm:$0xff]
    %v461 = vld [vmem:[#allocation5 + $0x120] sm:$0xff]
    %v462 = vld [vmem:[#allocation5 + $0x128] sm:$0xff]
    %v463 = vld [vmem:[#allocation5 + $0x130] sm:$0xff]
    %v464 = vld [vmem:[#allocation5 + $0x138] sm:$0xff]
    %v465 = vld [vmem:[#allocation5 + $0x140] sm:$0xff]
    %v466 = vld [vmem:[#allocation5 + $0x148] sm:$0xff]
    %v467 = vld [vmem:[#allocation5 + $0x150] sm:$0xff]
    %v468 = vld [vmem:[#allocation5 + $0x158] sm:$0xff]
    %v469 = vld [vmem:[#allocation5 + $0x160] sm:$0xff]
    %v470 = vld [vmem:[#allocation5 + $0x168] sm:$0xff]
    %v471 = vld [vmem:[#allocation5 + $0x170] sm:$0xff]
    %v472 = vld [vmem:[#allocation5 + $0x178] sm:$0xff]
    %v473 = vld [vmem:[#allocation5 + $0x180] sm:$0xff]
    %v474 = vld [vmem:[#allocation5 + $0x188] sm:$0xff]
    %v475 = vld [vmem:[#allocation5 + $0x190] sm:$0xff]
    %v476 = vld [vmem:[#allocation5 + $0x198] sm:$0xff]
    %v477 = vld [vmem:[#allocation5 + $0x1a0] sm:$0xff]
    %v478 = vld [vmem:[#allocation5 + $0x1a8] sm:$0xff]
    %v479 = vld [vmem:[#allocation5 + $0x1b0] sm:$0xff]
    %v480 = vld [vmem:[#allocation5 + $0x1b8] sm:$0xff]
    %v481 = vld [vmem:[#allocation5 + $0x1c0] sm:$0xff]
    %v482 = vld [vmem:[#allocation5 + $0x1c8] sm:$0xff]
    %v483 = vld [vmem:[#allocation5 + $0x1d0] sm:$0xff]
    %v484 = vld [vmem:[#allocation5 + $0x1d8] sm:$0xff]
    %v485 = vld [vmem:[#allocation5 + $0x1e0] sm:$0xff]
    %v486 = vld [vmem:[#allocation5 + $0x1e8] sm:$0xff]
    %v487 = vld [vmem:[#allocation5 + $0x1f0] sm:$0xff]
    %v488 = vld [vmem:[#allocation5 + $0x1f8] sm:$0xff]
    %v489 = vld [vmem:[#allocation5 + $0x200] sm:$0xff]
    %v490 = vld [vmem:[#allocation5 + $0x208] sm:$0xff]
    %v491 = vld [vmem:[#allocation5 + $0x210] sm:$0xff]
    %v492 = vld [vmem:[#allocation5 + $0x218] sm:$0xff]
    %v493 = vld [vmem:[#allocation5 + $0x220] sm:$0xff]
    %v494 = vld [vmem:[#allocation5 + $0x228] sm:$0xff]
    %v495 = vld [vmem:[#allocation5 + $0x230] sm:$0xff]
    %v496 = vld [vmem:[#allocation5 + $0x238] sm:$0xff]
    %v497 = vld [vmem:[#allocation5 + $0x240] sm:$0xff]
    %v498 = vld [vmem:[#allocation5 + $0x248] sm:$0xff]
    %v499 = vld [vmem:[#allocation5 + $0x250] sm:$0xff]
    %v500 = vld [vmem:[#allocation5 + $0x258] sm:$0xff]
    %v501 = vld [vmem:[#allocation5 + $0x260] sm:$0xff]
    %v502 = vld [vmem:[#allocation5 + $0x268] sm:$0xff]
    %v503 = vld [vmem:[#allocation5 + $0x270] sm:$0xff]
    %v504 = vld [vmem:[#allocation5 + $0x278] sm:$0xff]
    %v505 = vld [vmem:[#allocation5 + $0x280] sm:$0xff]
    %v506 = vld [vmem:[#allocation5 + $0x288] sm:$0xff]
    %v507 = vld [vmem:[#allocation5 + $0x290] sm:$0xff]
    %v508 = vld [vmem:[#allocation5 + $0x298] sm:$0xff]
    %v509 = vld [vmem:[#allocation5 + $0x2a0] sm:$0xff]
    %v510 = vld [vmem:[#allocation5 + $0x2a8] sm:$0xff]
    %v511 = vld [vmem:[#allocation5 + $0x2b0] sm:$0xff]
    %v512 = vld [vmem:[#allocation5 + $0x2b8] sm:$0xff]
    %v513 = vld [vmem:[#allocation5 + $0x2c0] sm:$0xff]
    %v514 = vld [vmem:[#allocation5 + $0x2c8] sm:$0xff]
    %v515 = vld [vmem:[#allocation5 + $0x2d0] sm:$0xff]
    %v516 = vld [vmem:[#allocation5 + $0x2d8] sm:$0xff]
    %v517 = vld [vmem:[#allocation5 + $0x2e0] sm:$0xff]
    %v518 = vld [vmem:[#allocation5 + $0x2e8] sm:$0xff]
    %v519 = vld [vmem:[#allocation5 + $0x2f0] sm:$0xff]
    %v520 = vld [vmem:[#allocation5 + $0x2f8] sm:$0xff]
    %v521 = vld [vmem:[#allocation5 + $0x300] sm:$0xff]
    %v522 = vld [vmem:[#allocation5 + $0x308] sm:$0xff]
    %v523 = vld [vmem:[#allocation5 + $0x310] sm:$0xff]
    %v524 = vld [vmem:[#allocation5 + $0x318] sm:$0xff]
    %v525 = vld [vmem:[#allocation5 + $0x320] sm:$0xff]
    %v526 = vld [vmem:[#allocation5 + $0x328] sm:$0xff]
    %v527 = vld [vmem:[#allocation5 + $0x330] sm:$0xff]
    %v528 = vld [vmem:[#allocation5 + $0x338] sm:$0xff]
    %v529 = vld [vmem:[#allocation5 + $0x340] sm:$0xff]
    %v530 = vld [vmem:[#allocation5 + $0x348] sm:$0xff]
    %v531 = vld [vmem:[#allocation5 + $0x350] sm:$0xff]
    %v532 = vld [vmem:[#allocation5 + $0x358] sm:$0xff]
    %v533 = vld [vmem:[#allocation5 + $0x360] sm:$0xff]
    %v534 = vld [vmem:[#allocation5 + $0x368] sm:$0xff]
    %v535 = vld [vmem:[#allocation5 + $0x370] sm:$0xff]
    %v536 = vld [vmem:[#allocation5 + $0x378] sm:$0xff]
    %v537 = vld [vmem:[#allocation5 + $0x380] sm:$0xff]
    %v538 = vld [vmem:[#allocation5 + $0x388] sm:$0xff]
    %v539 = vld [vmem:[#allocation5 + $0x390] sm:$0xff]
    %v540 = vld [vmem:[#allocation5 + $0x398] sm:$0xff]
    %v541 = vld [vmem:[#allocation5 + $0x3a0] sm:$0xff]
    %v542 = vld [vmem:[#allocation5 + $0x3a8] sm:$0xff]
    %v543 = vld [vmem:[#allocation5 + $0x3b0] sm:$0xff]
    %v544 = vld [vmem:[#allocation5 + $0x3b8] sm:$0xff]
    %v545 = vld [vmem:[#allocation5 + $0x3c0] sm:$0xff]
    %v546 = vld [vmem:[#allocation5 + $0x3c8] sm:$0xff]
    %v547 = vld [vmem:[#allocation5 + $0x3d0] sm:$0xff]
    %v548 = vld [vmem:[#allocation5 + $0x3d8] sm:$0xff]
    %v549 = vld [vmem:[#allocation5 + $0x3e0] sm:$0xff]
    %v550 = vld [vmem:[#allocation5 + $0x3e8] sm:$0xff]
    %v551 = vld [vmem:[#allocation5 + $0x3f0] sm:$0xff]
    %v552 = vld [vmem:[#allocation5 + $0x3f8] sm:$0xff]
    %v553 = vld [vmem:[#allocation5 + $0x400] sm:$0xff]
    %v554 = vld [vmem:[#allocation5 + $0x408] sm:$0xff]
    %v555 = vld [vmem:[#allocation5 + $0x410] sm:$0xff]
    %v556 = vld [vmem:[#allocation5 + $0x418] sm:$0xff]
    %v557 = vld [vmem:[#allocation5 + $0x420] sm:$0xff]
    %v558 = vld [vmem:[#allocation5 + $0x428] sm:$0xff]
    %v559 = vld [vmem:[#allocation5 + $0x430] sm:$0xff]
    %v560 = vld [vmem:[#allocation5 + $0x438] sm:$0xff]
    %v561 = vld [vmem:[#allocation5 + $0x440] sm:$0xff]
    %v562 = vld [vmem:[#allocation5 + $0x448] sm:$0xff]
    %v563 = vld [vmem:[#allocation5 + $0x450] sm:$0xff]
    %v564 = vld [vmem:[#allocation5 + $0x458] sm:$0xff]
    %v565 = vld [vmem:[#allocation5 + $0x460] sm:$0xff]
    %v566 = vld [vmem:[#allocation5 + $0x468] sm:$0xff]
    %v567 = vld [vmem:[#allocation5 + $0x470] sm:$0xff]
    %v568 = vld [vmem:[#allocation5 + $0x478] sm:$0xff]
    %v569 = vld [vmem:[#allocation5 + $0x480] sm:$0xff]
    %v570 = vld [vmem:[#allocation5 + $0x488] sm:$0xff]
    %v571 = vld [vmem:[#allocation5 + $0x490] sm:$0xff]
    %v572 = vld [vmem:[#allocation5 + $0x498] sm:$0xff]
    %v573 = vld [vmem:[#allocation5 + $0x4a0] sm:$0xff]
    %v574 = vld [vmem:[#allocation5 + $0x4a8] sm:$0xff]
    %v575 = vld [vmem:[#allocation5 + $0x4b0] sm:$0xff]
    %v576 = vld [vmem:[#allocation5 + $0x4b8] sm:$0xff]
    %v577 = vld [vmem:[#allocation5 + $0x4c0] sm:$0xff]
    %v578 = vld [vmem:[#allocation5 + $0x4c8] sm:$0xff]
    %v579 = vld [vmem:[#allocation5 + $0x4d0] sm:$0xff]
    %v580 = vld [vmem:[#allocation5 + $0x4d8] sm:$0xff]
    %v581 = vld [vmem:[#allocation5 + $0x4e0] sm:$0xff]
    %v582 = vld [vmem:[#allocation5 + $0x4e8] sm:$0xff]
    %v583 = vld [vmem:[#allocation5 + $0x4f0] sm:$0xff]
    %v584 = vld [vmem:[#allocation5 + $0x4f8] sm:$0xff]
    %v585 = vld [vmem:[#allocation5 + $0x500] sm:$0xff]
    %v586 = vld [vmem:[#allocation5 + $0x508] sm:$0xff]
    %v587 = vld [vmem:[#allocation5 + $0x510] sm:$0xff]
    %v588 = vld [vmem:[#allocation5 + $0x518] sm:$0xff]
    %v589 = vld [vmem:[#allocation5 + $0x520] sm:$0xff]
    %v590 = vld [vmem:[#allocation5 + $0x528] sm:$0xff]
    %v591 = vld [vmem:[#allocation5 + $0x530] sm:$0xff]
    %v592 = vld [vmem:[#allocation5 + $0x538] sm:$0xff]
    %v593 = vld [vmem:[#allocation5 + $0x540] sm:$0xff]
    %v594 = vld [vmem:[#allocation5 + $0x548] sm:$0xff]
    %v595 = vld [vmem:[#allocation5 + $0x550] sm:$0xff]
    %v596 = vld [vmem:[#allocation5 + $0x558] sm:$0xff]
    %v597 = vld [vmem:[#allocation5 + $0x560] sm:$0xff]
    %v598 = vld [vmem:[#allocation5 + $0x568] sm:$0xff]
    %v599 = vld [vmem:[#allocation5 + $0x570] sm:$0xff]
    %v600 = vld [vmem:[#allocation5 + $0x578] sm:$0xff]
    %v601 = vld [vmem:[#allocation5 + $0x580] sm:$0xff]
    %v602 = vld [vmem:[#allocation5 + $0x588] sm:$0xff]
    %v603 = vld [vmem:[#allocation5 + $0x590] sm:$0xff]
    %v604 = vld [vmem:[#allocation5 + $0x598] sm:$0xff]
    %v605 = vld [vmem:[#allocation5 + $0x5a0] sm:$0xff]
    %v606 = vld [vmem:[#allocation5 + $0x5a8] sm:$0xff]
    %v607 = vld [vmem:[#allocation5 + $0x5b0] sm:$0xff]
    %v608 = vld [vmem:[#allocation5 + $0x5b8] sm:$0xff]
    %v609 = vld [vmem:[#allocation5 + $0x5c0] sm:$0xff]
    %v610 = vld [vmem:[#allocation5 + $0x5c8] sm:$0xff]
    %v611 = vld [vmem:[#allocation5 + $0x5d0] sm:$0xff]
    %v612 = vld [vmem:[#allocation5 + $0x5d8] sm:$0xff]
    %v613 = vld [vmem:[#allocation5 + $0x5e0] sm:$0xff]
    %v614 = vld [vmem:[#allocation5 + $0x5e8] sm:$0xff]
    %v615 = vld [vmem:[#allocation5 + $0x5f0] sm:$0xff]
    %v616 = vld [vmem:[#allocation5 + $0x5f8] sm:$0xff]
    %v617 = vld [vmem:[%s4] sm:$0x3]
    %v619 = vlaneseq
    %v620 = vshrl.u32 %v619, 7
    %v621 = vsub.s32 0, %v620
    %v622 = vrot.slane %v617, %v621
    %v623 = vlaneseq
    %v624 = vshrl.u32 %v623, 7
    %v625 = vsub.s32 1, %v624
    %v626 = vrot.slane %v617, %v625
    %629 = vmatprep.subr.mxu0 %v456
    %630 = vmatpush1.msra.mxu0 %v455
    %631 = vmatprep.subr.mxu0 %v454
    %632 = vmatpush1.msra.mxu0 %v453
    %633 = vmatprep.subr.mxu0 %v452
    %634 = vmatpush1.msra.mxu0 %v451
    %635 = vmatprep.subr.mxu0 %v450
    %636 = vmatpush1.msra.mxu0 %v449
    %637 = vmatprep.subr.mxu0 %v448
    %638 = vmatpush1.msra.mxu0 %v447
    %639 = vmatprep.subr.mxu0 %v446
    %640 = vmatpush1.msra.mxu0 %v445
    %641 = vmatprep.subr.mxu0 %v444
    %642 = vmatpush1.msra.mxu0 %v443
    %643 = vmatprep.subr.mxu0 %v442
    %644 = vmatpush1.msra.mxu0 %v441
    %645 = vmatprep.subr.mxu0 %v440
    %646 = vmatpush1.msra.mxu0 %v439
    %647 = vmatprep.subr.mxu0 %v438
    %648 = vmatpush1.msra.mxu0 %v437
    %649 = vmatprep.subr.mxu0 %v436
    %650 = vmatpush1.msra.mxu0 %v435
    %651 = vmatprep.subr.mxu0 %v434
    %652 = vmatpush1.msra.mxu0 %v433
    %653 = vmatprep.subr.mxu0 %v432
    %654 = vmatpush1.msra.mxu0 %v431
    %655 = vmatprep.subr.mxu0 %v430
    %656 = vmatpush1.msra.mxu0 %v429
    %657 = vmatprep.subr.mxu0 %v428
    %658 = vmatpush1.msra.mxu0 %v427
    %659 = vmatprep.subr.mxu0 %v426
    %660 = vmatpush1.msra.mxu0 %v425
    %661 = vmatprep.subr.mxu0 %v488
    %662 = vmatpush2.msra.mxu0 %v487
    %663 = vmatprep.subr.mxu0 %v486
    %664 = vmatpush2.msra.mxu0 %v485
    %665 = vmatprep.subr.mxu0 %v484
    %666 = vmatpush2.msra.mxu0 %v483
    %667 = vmatprep.subr.mxu0 %v482
    %668 = vmatpush2.msra.mxu0 %v481
    %669 = vmatprep.subr.mxu0 %v480
    %670 = vmatpush2.msra.mxu0 %v479
    %671 = vmatprep.subr.mxu0 %v478
    %672 = vmatpush2.msra.mxu0 %v477
    %673 = vmatprep.subr.mxu0 %v476
    %674 = vmatpush2.msra.mxu0 %v475
    %675 = vmatprep.subr.mxu0 %v474
    %676 = vmatpush2.msra.mxu0 %v473
    %677 = vmatprep.subr.mxu0 %v472
    %678 = vmatpush2.msra.mxu0 %v471
    %679 = vmatprep.subr.mxu0 %v470
    %680 = vmatpush2.msra.mxu0 %v469
    %681 = vmatprep.subr.mxu0 %v468
    %682 = vmatpush2.msra.mxu0 %v467
    %683 = vmatprep.subr.mxu0 %v466
    %684 = vmatpush2.msra.mxu0 %v465
    %685 = vmatprep.subr.mxu0 %v464
    %686 = vmatpush2.msra.mxu0 %v463
    %687 = vmatprep.subr.mxu0 %v462
    %688 = vmatpush2.msra.mxu0 %v461
    %689 = vmatprep.subr.mxu0 %v460
    %690 = vmatpush2.msra.mxu0 %v459
    %691 = vmatprep.subr.mxu0 %v458
    %692 = vmatpush2.msra.mxu0 %v457
    %693 = vmatprep.mubr.f32.mxu0 %v422
    %694 = vmatmul.mubr.f32.gmra.mxu0 %v421
    %v695 = vpop.f32.mrf.mxu0
    %v696 = vadd.f32 %v622, %v695
    %v697 = vpop.f32.mrf.mxu0
    %v698 = vadd.f32 %v626, %v697
    %699 = vmatprep.mubr.f32.mxu0 %v424
    %700 = vmatmul.mubr.f32.gmra.mxu0 %v423
    %v701 = vpop.f32.mrf.mxu0
    %v702 = vadd.f32 %v622, %v701
    %v703 = vpop.f32.mrf.mxu0
    %v704 = vadd.f32 %v626, %v703
    %705 = vdwg.mxu0
    %706 = vmatprep.subr.mxu0 %v520
    %707 = vmatpush1.msra.mxu0 %v519
    %708 = vmatprep.subr.mxu0 %v518
    %709 = vmatpush1.msra.mxu0 %v517
    %710 = vmatprep.subr.mxu0 %v516
    %711 = vmatpush1.msra.mxu0 %v515
    %712 = vmatprep.subr.mxu0 %v514
    %713 = vmatpush1.msra.mxu0 %v513
    %714 = vmatprep.subr.mxu0 %v512
    %715 = vmatpush1.msra.mxu0 %v511
    %716 = vmatprep.subr.mxu0 %v510
    %717 = vmatpush1.msra.mxu0 %v509
    %718 = vmatprep.subr.mxu0 %v508
    %719 = vmatpush1.msra.mxu0 %v507
    %720 = vmatprep.subr.mxu0 %v506
    %721 = vmatpush1.msra.mxu0 %v505
    %722 = vmatprep.subr.mxu0 %v504
    %723 = vmatpush1.msra.mxu0 %v503
    %724 = vmatprep.subr.mxu0 %v502
    %725 = vmatpush1.msra.mxu0 %v501
    %726 = vmatprep.subr.mxu0 %v500
    %727 = vmatpush1.msra.mxu0 %v499
    %728 = vmatprep.subr.mxu0 %v498
    %729 = vmatpush1.msra.mxu0 %v497
    %730 = vmatprep.subr.mxu0 %v496
    %731 = vmatpush1.msra.mxu0 %v495
    %732 = vmatprep.subr.mxu0 %v494
    %733 = vmatpush1.msra.mxu0 %v493
    %734 = vmatprep.subr.mxu0 %v492
    %735 = vmatpush1.msra.mxu0 %v491
    %736 = vmatprep.subr.mxu0 %v490
    %737 = vmatpush1.msra.mxu0 %v489
    %738 = vmatprep.subr.mxu0 %v552
    %739 = vmatpush2.msra.mxu0 %v551
    %740 = vmatprep.subr.mxu0 %v550
    %741 = vmatpush2.msra.mxu0 %v549
    %742 = vmatprep.subr.mxu0 %v548
    %743 = vmatpush2.msra.mxu0 %v547
    %744 = vmatprep.subr.mxu0 %v546
    %745 = vmatpush2.msra.mxu0 %v545
    %746 = vmatprep.subr.mxu0 %v544
    %747 = vmatpush2.msra.mxu0 %v543
    %748 = vmatprep.subr.mxu0 %v542
    %749 = vmatpush2.msra.mxu0 %v541
    %750 = vmatprep.subr.mxu0 %v540
    %751 = vmatpush2.msra.mxu0 %v539
    %752 = vmatprep.subr.mxu0 %v538
    %753 = vmatpush2.msra.mxu0 %v537
    %754 = vmatprep.subr.mxu0 %v536
    %755 = vmatpush2.msra.mxu0 %v535
    %756 = vmatprep.subr.mxu0 %v534
    %757 = vmatpush2.msra.mxu0 %v533
    %758 = vmatprep.subr.mxu0 %v532
    %759 = vmatpush2.msra.mxu0 %v531
    %760 = vmatprep.subr.mxu0 %v530
    %761 = vmatpush2.msra.mxu0 %v529
    %762 = vmatprep.subr.mxu0 %v528
    %763 = vmatpush2.msra.mxu0 %v527
    %764 = vmatprep.subr.mxu0 %v526
    %765 = vmatpush2.msra.mxu0 %v525
    %766 = vmatprep.subr.mxu0 %v524
    %767 = vmatpush2.msra.mxu0 %v523
    %768 = vmatprep.subr.mxu0 %v522
    %769 = vmatpush2.msra.mxu0 %v521
    %770 = vmatprep.mubr.f32.mxu0 %v401
    %771 = vmatmul.mubr.f32.gmra.mxu0 %v400
    %v772 = vpop.f32.mrf.mxu0
    %v773 = vadd.f32 %v696, %v772
    %v774 = vpop.f32.mrf.mxu0
    %v775 = vadd.f32 %v698, %v774
    %776 = vmatprep.mubr.f32.mxu0 %v405
    %777 = vmatmul.mubr.f32.gmra.mxu0 %v404
    %v778 = vpop.f32.mrf.mxu0
    %v779 = vadd.f32 %v702, %v778
    %v780 = vpop.f32.mrf.mxu0
    %v781 = vadd.f32 %v704, %v780
    %782 = vdwg.mxu0
    %783 = vmatprep.subr.mxu0 %v584
    %784 = vmatpush1.msra.mxu0 %v583
    %785 = vmatprep.subr.mxu0 %v582
    %786 = vmatpush1.msra.mxu0 %v581
    %787 = vmatprep.subr.mxu0 %v580
    %788 = vmatpush1.msra.mxu0 %v579
    %789 = vmatprep.subr.mxu0 %v578
    %790 = vmatpush1.msra.mxu0 %v577
    %791 = vmatprep.subr.mxu0 %v576
    %792 = vmatpush1.msra.mxu0 %v575
    %793 = vmatprep.subr.mxu0 %v574
    %794 = vmatpush1.msra.mxu0 %v573
    %795 = vmatprep.subr.mxu0 %v572
    %796 = vmatpush1.msra.mxu0 %v571
    %797 = vmatprep.subr.mxu0 %v570
    %798 = vmatpush1.msra.mxu0 %v569
    %799 = vmatprep.subr.mxu0 %v568
    %800 = vmatpush1.msra.mxu0 %v567
    %801 = vmatprep.subr.mxu0 %v566
    %802 = vmatpush1.msra.mxu0 %v565
    %803 = vmatprep.subr.mxu0 %v564
    %804 = vmatpush1.msra.mxu0 %v563
    %805 = vmatprep.subr.mxu0 %v562
    %806 = vmatpush1.msra.mxu0 %v561
    %807 = vmatprep.subr.mxu0 %v560
    %808 = vmatpush1.msra.mxu0 %v559
    %809 = vmatprep.subr.mxu0 %v558
    %810 = vmatpush1.msra.mxu0 %v557
    %811 = vmatprep.subr.mxu0 %v556
    %812 = vmatpush1.msra.mxu0 %v555
    %813 = vmatprep.subr.mxu0 %v554
    %814 = vmatpush1.msra.mxu0 %v553
    %815 = vmatprep.subr.mxu0 %v616
    %816 = vmatpush2.msra.mxu0 %v615
    %817 = vmatprep.subr.mxu0 %v614
    %818 = vmatpush2.msra.mxu0 %v613
    %819 = vmatprep.subr.mxu0 %v612
    %820 = vmatpush2.msra.mxu0 %v611
    %821 = vmatprep.subr.mxu0 %v610
    %822 = vmatpush2.msra.mxu0 %v609
    %823 = vmatprep.subr.mxu0 %v608
    %824 = vmatpush2.msra.mxu0 %v607
    %825 = vmatprep.subr.mxu0 %v606
    %826 = vmatpush2.msra.mxu0 %v605
    %827 = vmatprep.subr.mxu0 %v604
    %828 = vmatpush2.msra.mxu0 %v603
    %829 = vmatprep.subr.mxu0 %v602
    %830 = vmatpush2.msra.mxu0 %v601
    %831 = vmatprep.subr.mxu0 %v600
    %832 = vmatpush2.msra.mxu0 %v599
    %833 = vmatprep.subr.mxu0 %v598
    %834 = vmatpush2.msra.mxu0 %v597
    %835 = vmatprep.subr.mxu0 %v596
    %836 = vmatpush2.msra.mxu0 %v595
    %837 = vmatprep.subr.mxu0 %v594
    %838 = vmatpush2.msra.mxu0 %v593
    %839 = vmatprep.subr.mxu0 %v592
    %840 = vmatpush2.msra.mxu0 %v591
    %841 = vmatprep.subr.mxu0 %v590
    %842 = vmatpush2.msra.mxu0 %v589
    %843 = vmatprep.subr.mxu0 %v588
    %844 = vmatpush2.msra.mxu0 %v587
    %845 = vmatprep.subr.mxu0 %v586
    %846 = vmatpush2.msra.mxu0 %v585
    %847 = vmatprep.mubr.f32.mxu0 %v403
    %848 = vmatmul.mubr.f32.gmra.mxu0 %v402
    %v849 = vpop.f32.mrf.mxu0
    %v850 = vadd.f32 %v773, %v849
    %v851 = vpop.f32.mrf.mxu0
    %v852 = vadd.f32 %v775, %v851
    %853 = vmatprep.mubr.f32.mxu0 %v407
    %854 = vmatmul.mubr.f32.gmra.mxu0 %v406
    %v855 = vpop.f32.mrf.mxu0
    %v856 = vadd.f32 %v779, %v855
    %v857 = vpop.f32.mrf.mxu0
    %v858 = vadd.f32 %v781, %v857
    %859 = vdwg.mxu0
    %v860 = vrot.slane %v850, 7
    %v861 = vrot.slane %v852, 7
    %v862 = vrot.slane %v856, 7
    %v863 = vrot.slane %v858, 7
    %v864 = vsel %vm412, %v860, %v862
    %v865 = vsel %vm412, %v861, %v863
    %v866 = vsel %vm412, %v862, %v860
    %v867 = vsel %vm412, %v863, %v861
    %v868 = vsel %vm419, %v866, 0.0
    %v869 = vsel %vm419, %v867, 0.0
    %v870 = vsel %vm420, %v864, 0.0
    %v871 = vsel %vm420, %v865, 0.0
    %v872 = vrot.slane %v850, 1
    %v873 = vrot.slane %v852, 1
    %v874 = vrot.slane %v856, 1
    %v875 = vrot.slane %v858, 1
    %vm876 = vcmp.lt.s32.totalorder %v149, 7
    %v877 = vsel %vm876, %v872, %v874
    %v878 = vsel %vm876, %v873, %v875
    %v879 = vsel %vm876, %v874, %v872
    %v880 = vsel %vm876, %v875, %v873
    %v881 = vsel %vm177, 1, 0
    %v882 = vsel %vm178, 1, 0
    %vm883 = vcmp.eq.s32.totalorder %v881, 1
    %vm884 = vcmp.eq.s32.totalorder %v882, 1
    %v885 = vsel %vm883, %v877, 0.0
    %v886 = vsel %vm883, %v878, 0.0
    %v887 = vsel %vm884, %v879, 0.0
    %v888 = vsel %vm884, %v880, 0.0
    %v889 = vld [vmem:[#allocation7] sm:$0xff]
    %v890 = vld [vmem:[#allocation7 + $0x8] sm:$0xff]
    %v891 = vld [vmem:[#allocation7 + $0x10] sm:$0xff]
    %v892 = vld [vmem:[#allocation7 + $0x18] sm:$0xff]
    %v893 = vld [vmem:[#allocation7 + $0x20] sm:$0xff]
    %v894 = vld [vmem:[#allocation7 + $0x28] sm:$0xff]
    %v895 = vld [vmem:[#allocation7 + $0x30] sm:$0xff]
    %v896 = vld [vmem:[#allocation7 + $0x38] sm:$0xff]
    %v897 = vld [vmem:[#allocation7 + $0x40] sm:$0xff]
    %v898 = vld [vmem:[#allocation7 + $0x48] sm:$0xff]
    %v899 = vld [vmem:[#allocation7 + $0x50] sm:$0xff]
    %v900 = vld [vmem:[#allocation7 + $0x58] sm:$0xff]
    %v901 = vld [vmem:[#allocation7 + $0x60] sm:$0xff]
    %v902 = vld [vmem:[#allocation7 + $0x68] sm:$0xff]
    %v903 = vld [vmem:[#allocation7 + $0x70] sm:$0xff]
    %v904 = vld [vmem:[#allocation7 + $0x78] sm:$0xff]
    %v905 = vld [vmem:[#allocation7 + $0x80] sm:$0xff]
    %v906 = vld [vmem:[#allocation7 + $0x88] sm:$0xff]
    %v907 = vld [vmem:[#allocation7 + $0x90] sm:$0xff]
    %v908 = vld [vmem:[#allocation7 + $0x98] sm:$0xff]
    %v909 = vld [vmem:[#allocation7 + $0xa0] sm:$0xff]
    %v910 = vld [vmem:[#allocation7 + $0xa8] sm:$0xff]
    %v911 = vld [vmem:[#allocation7 + $0xb0] sm:$0xff]
    %v912 = vld [vmem:[#allocation7 + $0xb8] sm:$0xff]
    %v913 = vld [vmem:[#allocation7 + $0xc0] sm:$0xff]
    %v914 = vld [vmem:[#allocation7 + $0xc8] sm:$0xff]
    %v915 = vld [vmem:[#allocation7 + $0xd0] sm:$0xff]
    %v916 = vld [vmem:[#allocation7 + $0xd8] sm:$0xff]
    %v917 = vld [vmem:[#allocation7 + $0xe0] sm:$0xff]
    %v918 = vld [vmem:[#allocation7 + $0xe8] sm:$0xff]
    %v919 = vld [vmem:[#allocation7 + $0xf0] sm:$0xff]
    %v920 = vld [vmem:[#allocation7 + $0xf8] sm:$0xff]
    %v921 = vld [vmem:[#allocation7 + $0x100] sm:$0xff]
    %v922 = vld [vmem:[#allocation7 + $0x108] sm:$0xff]
    %v923 = vld [vmem:[#allocation7 + $0x110] sm:$0xff]
    %v924 = vld [vmem:[#allocation7 + $0x118] sm:$0xff]
    %v925 = vld [vmem:[#allocation7 + $0x120] sm:$0xff]
    %v926 = vld [vmem:[#allocation7 + $0x128] sm:$0xff]
    %v927 = vld [vmem:[#allocation7 + $0x130] sm:$0xff]
    %v928 = vld [vmem:[#allocation7 + $0x138] sm:$0xff]
    %v929 = vld [vmem:[#allocation7 + $0x140] sm:$0xff]
    %v930 = vld [vmem:[#allocation7 + $0x148] sm:$0xff]
    %v931 = vld [vmem:[#allocation7 + $0x150] sm:$0xff]
    %v932 = vld [vmem:[#allocation7 + $0x158] sm:$0xff]
    %v933 = vld [vmem:[#allocation7 + $0x160] sm:$0xff]
    %v934 = vld [vmem:[#allocation7 + $0x168] sm:$0xff]
    %v935 = vld [vmem:[#allocation7 + $0x170] sm:$0xff]
    %v936 = vld [vmem:[#allocation7 + $0x178] sm:$0xff]
    %v937 = vld [vmem:[#allocation7 + $0x180] sm:$0xff]
    %v938 = vld [vmem:[#allocation7 + $0x188] sm:$0xff]
    %v939 = vld [vmem:[#allocation7 + $0x190] sm:$0xff]
    %v940 = vld [vmem:[#allocation7 + $0x198] sm:$0xff]
    %v941 = vld [vmem:[#allocation7 + $0x1a0] sm:$0xff]
    %v942 = vld [vmem:[#allocation7 + $0x1a8] sm:$0xff]
    %v943 = vld [vmem:[#allocation7 + $0x1b0] sm:$0xff]
    %v944 = vld [vmem:[#allocation7 + $0x1b8] sm:$0xff]
    %v945 = vld [vmem:[#allocation7 + $0x1c0] sm:$0xff]
    %v946 = vld [vmem:[#allocation7 + $0x1c8] sm:$0xff]
    %v947 = vld [vmem:[#allocation7 + $0x1d0] sm:$0xff]
    %v948 = vld [vmem:[#allocation7 + $0x1d8] sm:$0xff]
    %v949 = vld [vmem:[#allocation7 + $0x1e0] sm:$0xff]
    %v950 = vld [vmem:[#allocation7 + $0x1e8] sm:$0xff]
    %v951 = vld [vmem:[#allocation7 + $0x1f0] sm:$0xff]
    %v952 = vld [vmem:[#allocation7 + $0x1f8] sm:$0xff]
    %v953 = vld [vmem:[#allocation7 + $0x200] sm:$0xff]
    %v954 = vld [vmem:[#allocation7 + $0x208] sm:$0xff]
    %v955 = vld [vmem:[#allocation7 + $0x210] sm:$0xff]
    %v956 = vld [vmem:[#allocation7 + $0x218] sm:$0xff]
    %v957 = vld [vmem:[#allocation7 + $0x220] sm:$0xff]
    %v958 = vld [vmem:[#allocation7 + $0x228] sm:$0xff]
    %v959 = vld [vmem:[#allocation7 + $0x230] sm:$0xff]
    %v960 = vld [vmem:[#allocation7 + $0x238] sm:$0xff]
    %v961 = vld [vmem:[#allocation7 + $0x240] sm:$0xff]
    %v962 = vld [vmem:[#allocation7 + $0x248] sm:$0xff]
    %v963 = vld [vmem:[#allocation7 + $0x250] sm:$0xff]
    %v964 = vld [vmem:[#allocation7 + $0x258] sm:$0xff]
    %v965 = vld [vmem:[#allocation7 + $0x260] sm:$0xff]
    %v966 = vld [vmem:[#allocation7 + $0x268] sm:$0xff]
    %v967 = vld [vmem:[#allocation7 + $0x270] sm:$0xff]
    %v968 = vld [vmem:[#allocation7 + $0x278] sm:$0xff]
    %v969 = vld [vmem:[#allocation7 + $0x280] sm:$0xff]
    %v970 = vld [vmem:[#allocation7 + $0x288] sm:$0xff]
    %v971 = vld [vmem:[#allocation7 + $0x290] sm:$0xff]
    %v972 = vld [vmem:[#allocation7 + $0x298] sm:$0xff]
    %v973 = vld [vmem:[#allocation7 + $0x2a0] sm:$0xff]
    %v974 = vld [vmem:[#allocation7 + $0x2a8] sm:$0xff]
    %v975 = vld [vmem:[#allocation7 + $0x2b0] sm:$0xff]
    %v976 = vld [vmem:[#allocation7 + $0x2b8] sm:$0xff]
    %v977 = vld [vmem:[#allocation7 + $0x2c0] sm:$0xff]
    %v978 = vld [vmem:[#allocation7 + $0x2c8] sm:$0xff]
    %v979 = vld [vmem:[#allocation7 + $0x2d0] sm:$0xff]
    %v980 = vld [vmem:[#allocation7 + $0x2d8] sm:$0xff]
    %v981 = vld [vmem:[#allocation7 + $0x2e0] sm:$0xff]
    %v982 = vld [vmem:[#allocation7 + $0x2e8] sm:$0xff]
    %v983 = vld [vmem:[#allocation7 + $0x2f0] sm:$0xff]
    %v984 = vld [vmem:[#allocation7 + $0x2f8] sm:$0xff]
    %v985 = vld [vmem:[#allocation7 + $0x300] sm:$0xff]
    %v986 = vld [vmem:[#allocation7 + $0x308] sm:$0xff]
    %v987 = vld [vmem:[#allocation7 + $0x310] sm:$0xff]
    %v988 = vld [vmem:[#allocation7 + $0x318] sm:$0xff]
    %v989 = vld [vmem:[#allocation7 + $0x320] sm:$0xff]
    %v990 = vld [vmem:[#allocation7 + $0x328] sm:$0xff]
    %v991 = vld [vmem:[#allocation7 + $0x330] sm:$0xff]
    %v992 = vld [vmem:[#allocation7 + $0x338] sm:$0xff]
    %v993 = vld [vmem:[#allocation7 + $0x340] sm:$0xff]
    %v994 = vld [vmem:[#allocation7 + $0x348] sm:$0xff]
    %v995 = vld [vmem:[#allocation7 + $0x350] sm:$0xff]
    %v996 = vld [vmem:[#allocation7 + $0x358] sm:$0xff]
    %v997 = vld [vmem:[#allocation7 + $0x360] sm:$0xff]
    %v998 = vld [vmem:[#allocation7 + $0x368] sm:$0xff]
    %v999 = vld [vmem:[#allocation7 + $0x370] sm:$0xff]
    %v1000 = vld [vmem:[#allocation7 + $0x378] sm:$0xff]
    %v1001 = vld [vmem:[#allocation7 + $0x380] sm:$0xff]
    %v1002 = vld [vmem:[#allocation7 + $0x388] sm:$0xff]
    %v1003 = vld [vmem:[#allocation7 + $0x390] sm:$0xff]
    %v1004 = vld [vmem:[#allocation7 + $0x398] sm:$0xff]
    %v1005 = vld [vmem:[#allocation7 + $0x3a0] sm:$0xff]
    %v1006 = vld [vmem:[#allocation7 + $0x3a8] sm:$0xff]
    %v1007 = vld [vmem:[#allocation7 + $0x3b0] sm:$0xff]
    %v1008 = vld [vmem:[#allocation7 + $0x3b8] sm:$0xff]
    %v1009 = vld [vmem:[#allocation7 + $0x3c0] sm:$0xff]
    %v1010 = vld [vmem:[#allocation7 + $0x3c8] sm:$0xff]
    %v1011 = vld [vmem:[#allocation7 + $0x3d0] sm:$0xff]
    %v1012 = vld [vmem:[#allocation7 + $0x3d8] sm:$0xff]
    %v1013 = vld [vmem:[#allocation7 + $0x3e0] sm:$0xff]
    %v1014 = vld [vmem:[#allocation7 + $0x3e8] sm:$0xff]
    %v1015 = vld [vmem:[#allocation7 + $0x3f0] sm:$0xff]
    %v1016 = vld [vmem:[#allocation7 + $0x3f8] sm:$0xff]
    %v1017 = vld [vmem:[#allocation7 + $0x400] sm:$0xff]
    %v1018 = vld [vmem:[#allocation7 + $0x408] sm:$0xff]
    %v1019 = vld [vmem:[#allocation7 + $0x410] sm:$0xff]
    %v1020 = vld [vmem:[#allocation7 + $0x418] sm:$0xff]
    %v1021 = vld [vmem:[#allocation7 + $0x420] sm:$0xff]
    %v1022 = vld [vmem:[#allocation7 + $0x428] sm:$0xff]
    %v1023 = vld [vmem:[#allocation7 + $0x430] sm:$0xff]
    %v1024 = vld [vmem:[#allocation7 + $0x438] sm:$0xff]
    %v1025 = vld [vmem:[#allocation7 + $0x440] sm:$0xff]
    %v1026 = vld [vmem:[#allocation7 + $0x448] sm:$0xff]
    %v1027 = vld [vmem:[#allocation7 + $0x450] sm:$0xff]
    %v1028 = vld [vmem:[#allocation7 + $0x458] sm:$0xff]
    %v1029 = vld [vmem:[#allocation7 + $0x460] sm:$0xff]
    %v1030 = vld [vmem:[#allocation7 + $0x468] sm:$0xff]
    %v1031 = vld [vmem:[#allocation7 + $0x470] sm:$0xff]
    %v1032 = vld [vmem:[#allocation7 + $0x478] sm:$0xff]
    %v1033 = vld [vmem:[#allocation7 + $0x480] sm:$0xff]
    %v1034 = vld [vmem:[#allocation7 + $0x488] sm:$0xff]
    %v1035 = vld [vmem:[#allocation7 + $0x490] sm:$0xff]
    %v1036 = vld [vmem:[#allocation7 + $0x498] sm:$0xff]
    %v1037 = vld [vmem:[#allocation7 + $0x4a0] sm:$0xff]
    %v1038 = vld [vmem:[#allocation7 + $0x4a8] sm:$0xff]
    %v1039 = vld [vmem:[#allocation7 + $0x4b0] sm:$0xff]
    %v1040 = vld [vmem:[#allocation7 + $0x4b8] sm:$0xff]
    %v1041 = vld [vmem:[#allocation7 + $0x4c0] sm:$0xff]
    %v1042 = vld [vmem:[#allocation7 + $0x4c8] sm:$0xff]
    %v1043 = vld [vmem:[#allocation7 + $0x4d0] sm:$0xff]
    %v1044 = vld [vmem:[#allocation7 + $0x4d8] sm:$0xff]
    %v1045 = vld [vmem:[#allocation7 + $0x4e0] sm:$0xff]
    %v1046 = vld [vmem:[#allocation7 + $0x4e8] sm:$0xff]
    %v1047 = vld [vmem:[#allocation7 + $0x4f0] sm:$0xff]
    %v1048 = vld [vmem:[#allocation7 + $0x4f8] sm:$0xff]
    %v1049 = vld [vmem:[#allocation7 + $0x500] sm:$0xff]
    %v1050 = vld [vmem:[#allocation7 + $0x508] sm:$0xff]
    %v1051 = vld [vmem:[#allocation7 + $0x510] sm:$0xff]
    %v1052 = vld [vmem:[#allocation7 + $0x518] sm:$0xff]
    %v1053 = vld [vmem:[#allocation7 + $0x520] sm:$0xff]
    %v1054 = vld [vmem:[#allocation7 + $0x528] sm:$0xff]
    %v1055 = vld [vmem:[#allocation7 + $0x530] sm:$0xff]
    %v1056 = vld [vmem:[#allocation7 + $0x538] sm:$0xff]
    %v1057 = vld [vmem:[#allocation7 + $0x540] sm:$0xff]
    %v1058 = vld [vmem:[#allocation7 + $0x548] sm:$0xff]
    %v1059 = vld [vmem:[#allocation7 + $0x550] sm:$0xff]
    %v1060 = vld [vmem:[#allocation7 + $0x558] sm:$0xff]
    %v1061 = vld [vmem:[#allocation7 + $0x560] sm:$0xff]
    %v1062 = vld [vmem:[#allocation7 + $0x568] sm:$0xff]
    %v1063 = vld [vmem:[#allocation7 + $0x570] sm:$0xff]
    %v1064 = vld [vmem:[#allocation7 + $0x578] sm:$0xff]
    %v1065 = vld [vmem:[#allocation7 + $0x580] sm:$0xff]
    %v1066 = vld [vmem:[#allocation7 + $0x588] sm:$0xff]
    %v1067 = vld [vmem:[#allocation7 + $0x590] sm:$0xff]
    %v1068 = vld [vmem:[#allocation7 + $0x598] sm:$0xff]
    %v1069 = vld [vmem:[#allocation7 + $0x5a0] sm:$0xff]
    %v1070 = vld [vmem:[#allocation7 + $0x5a8] sm:$0xff]
    %v1071 = vld [vmem:[#allocation7 + $0x5b0] sm:$0xff]
    %v1072 = vld [vmem:[#allocation7 + $0x5b8] sm:$0xff]
    %v1073 = vld [vmem:[#allocation7 + $0x5c0] sm:$0xff]
    %v1074 = vld [vmem:[#allocation7 + $0x5c8] sm:$0xff]
    %v1075 = vld [vmem:[#allocation7 + $0x5d0] sm:$0xff]
    %v1076 = vld [vmem:[#allocation7 + $0x5d8] sm:$0xff]
    %v1077 = vld [vmem:[#allocation7 + $0x5e0] sm:$0xff]
    %v1078 = vld [vmem:[#allocation7 + $0x5e8] sm:$0xff]
    %v1079 = vld [vmem:[#allocation7 + $0x5f0] sm:$0xff]
    %v1080 = vld [vmem:[#allocation7 + $0x5f8] sm:$0xff]
    %v1081 = vld [vmem:[#allocation8] sm:$0x3]
    %v1083 = vlaneseq
    %v1084 = vshrl.u32 %v1083, 7
    %v1085 = vsub.s32 0, %v1084
    %v1086 = vrot.slane %v1081, %v1085
    %v1087 = vlaneseq
    %v1088 = vshrl.u32 %v1087, 7
    %v1089 = vsub.s32 1, %v1088
    %v1090 = vrot.slane %v1081, %v1089
    %1093 = vmatprep.subr.mxu0 %v920
    %1094 = vmatpush1.msra.mxu0 %v919
    %1095 = vmatprep.subr.mxu0 %v918
    %1096 = vmatpush1.msra.mxu0 %v917
    %1097 = vmatprep.subr.mxu0 %v916
    %1098 = vmatpush1.msra.mxu0 %v915
    %1099 = vmatprep.subr.mxu0 %v914
    %1100 = vmatpush1.msra.mxu0 %v913
    %1101 = vmatprep.subr.mxu0 %v912
    %1102 = vmatpush1.msra.mxu0 %v911
    %1103 = vmatprep.subr.mxu0 %v910
    %1104 = vmatpush1.msra.mxu0 %v909
    %1105 = vmatprep.subr.mxu0 %v908
    %1106 = vmatpush1.msra.mxu0 %v907
    %1107 = vmatprep.subr.mxu0 %v906
    %1108 = vmatpush1.msra.mxu0 %v905
    %1109 = vmatprep.subr.mxu0 %v904
    %1110 = vmatpush1.msra.mxu0 %v903
    %1111 = vmatprep.subr.mxu0 %v902
    %1112 = vmatpush1.msra.mxu0 %v901
    %1113 = vmatprep.subr.mxu0 %v900
    %1114 = vmatpush1.msra.mxu0 %v899
    %1115 = vmatprep.subr.mxu0 %v898
    %1116 = vmatpush1.msra.mxu0 %v897
    %1117 = vmatprep.subr.mxu0 %v896
    %1118 = vmatpush1.msra.mxu0 %v895
    %1119 = vmatprep.subr.mxu0 %v894
    %1120 = vmatpush1.msra.mxu0 %v893
    %1121 = vmatprep.subr.mxu0 %v892
    %1122 = vmatpush1.msra.mxu0 %v891
    %1123 = vmatprep.subr.mxu0 %v890
    %1124 = vmatpush1.msra.mxu0 %v889
    %1125 = vmatprep.subr.mxu0 %v952
    %1126 = vmatpush2.msra.mxu0 %v951
    %1127 = vmatprep.subr.mxu0 %v950
    %1128 = vmatpush2.msra.mxu0 %v949
    %1129 = vmatprep.subr.mxu0 %v948
    %1130 = vmatpush2.msra.mxu0 %v947
    %1131 = vmatprep.subr.mxu0 %v946
    %1132 = vmatpush2.msra.mxu0 %v945
    %1133 = vmatprep.subr.mxu0 %v944
    %1134 = vmatpush2.msra.mxu0 %v943
    %1135 = vmatprep.subr.mxu0 %v942
    %1136 = vmatpush2.msra.mxu0 %v941
    %1137 = vmatprep.subr.mxu0 %v940
    %1138 = vmatpush2.msra.mxu0 %v939
    %1139 = vmatprep.subr.mxu0 %v938
    %1140 = vmatpush2.msra.mxu0 %v937
    %1141 = vmatprep.subr.mxu0 %v936
    %1142 = vmatpush2.msra.mxu0 %v935
    %1143 = vmatprep.subr.mxu0 %v934
    %1144 = vmatpush2.msra.mxu0 %v933
    %1145 = vmatprep.subr.mxu0 %v932
    %1146 = vmatpush2.msra.mxu0 %v931
    %1147 = vmatprep.subr.mxu0 %v930
    %1148 = vmatpush2.msra.mxu0 %v929
    %1149 = vmatprep.subr.mxu0 %v928
    %1150 = vmatpush2.msra.mxu0 %v927
    %1151 = vmatprep.subr.mxu0 %v926
    %1152 = vmatpush2.msra.mxu0 %v925
    %1153 = vmatprep.subr.mxu0 %v924
    %1154 = vmatpush2.msra.mxu0 %v923
    %1155 = vmatprep.subr.mxu0 %v922
    %1156 = vmatpush2.msra.mxu0 %v921
    %1157 = vmatprep.mubr.f32.mxu0 %v869
    %1158 = vmatmul.mubr.f32.gmra.mxu0 %v868
    %v1159 = vpop.f32.mrf.mxu0
    %v1160 = vadd.f32 %v1086, %v1159
    %v1161 = vpop.f32.mrf.mxu0
    %v1162 = vadd.f32 %v1090, %v1161
    %1163 = vmatprep.mubr.f32.mxu0 %v871
    %1164 = vmatmul.mubr.f32.gmra.mxu0 %v870
    %v1165 = vpop.f32.mrf.mxu0
    %v1166 = vadd.f32 %v1086, %v1165
    %v1167 = vpop.f32.mrf.mxu0
    %v1168 = vadd.f32 %v1090, %v1167
    %1169 = vdwg.mxu0
    %1170 = vmatprep.subr.mxu0 %v984
    %1171 = vmatpush1.msra.mxu0 %v983
    %1172 = vmatprep.subr.mxu0 %v982
    %1173 = vmatpush1.msra.mxu0 %v981
    %1174 = vmatprep.subr.mxu0 %v980
    %1175 = vmatpush1.msra.mxu0 %v979
    %1176 = vmatprep.subr.mxu0 %v978
    %1177 = vmatpush1.msra.mxu0 %v977
    %1178 = vmatprep.subr.mxu0 %v976
    %1179 = vmatpush1.msra.mxu0 %v975
    %1180 = vmatprep.subr.mxu0 %v974
    %1181 = vmatpush1.msra.mxu0 %v973
    %1182 = vmatprep.subr.mxu0 %v972
    %1183 = vmatpush1.msra.mxu0 %v971
    %1184 = vmatprep.subr.mxu0 %v970
    %1185 = vmatpush1.msra.mxu0 %v969
    %1186 = vmatprep.subr.mxu0 %v968
    %1187 = vmatpush1.msra.mxu0 %v967
    %1188 = vmatprep.subr.mxu0 %v966
    %1189 = vmatpush1.msra.mxu0 %v965
    %1190 = vmatprep.subr.mxu0 %v964
    %1191 = vmatpush1.msra.mxu0 %v963
    %1192 = vmatprep.subr.mxu0 %v962
    %1193 = vmatpush1.msra.mxu0 %v961
    %1194 = vmatprep.subr.mxu0 %v960
    %1195 = vmatpush1.msra.mxu0 %v959
    %1196 = vmatprep.subr.mxu0 %v958
    %1197 = vmatpush1.msra.mxu0 %v957
    %1198 = vmatprep.subr.mxu0 %v956
    %1199 = vmatpush1.msra.mxu0 %v955
    %1200 = vmatprep.subr.mxu0 %v954
    %1201 = vmatpush1.msra.mxu0 %v953
    %1202 = vmatprep.subr.mxu0 %v1016
    %1203 = vmatpush2.msra.mxu0 %v1015
    %1204 = vmatprep.subr.mxu0 %v1014
    %1205 = vmatpush2.msra.mxu0 %v1013
    %1206 = vmatprep.subr.mxu0 %v1012
    %1207 = vmatpush2.msra.mxu0 %v1011
    %1208 = vmatprep.subr.mxu0 %v1010
    %1209 = vmatpush2.msra.mxu0 %v1009
    %1210 = vmatprep.subr.mxu0 %v1008
    %1211 = vmatpush2.msra.mxu0 %v1007
    %1212 = vmatprep.subr.mxu0 %v1006
    %1213 = vmatpush2.msra.mxu0 %v1005
    %1214 = vmatprep.subr.mxu0 %v1004
    %1215 = vmatpush2.msra.mxu0 %v1003
    %1216 = vmatprep.subr.mxu0 %v1002
    %1217 = vmatpush2.msra.mxu0 %v1001
    %1218 = vmatprep.subr.mxu0 %v1000
    %1219 = vmatpush2.msra.mxu0 %v999
    %1220 = vmatprep.subr.mxu0 %v998
    %1221 = vmatpush2.msra.mxu0 %v997
    %1222 = vmatprep.subr.mxu0 %v996
    %1223 = vmatpush2.msra.mxu0 %v995
    %1224 = vmatprep.subr.mxu0 %v994
    %1225 = vmatpush2.msra.mxu0 %v993
    %1226 = vmatprep.subr.mxu0 %v992
    %1227 = vmatpush2.msra.mxu0 %v991
    %1228 = vmatprep.subr.mxu0 %v990
    %1229 = vmatpush2.msra.mxu0 %v989
    %1230 = vmatprep.subr.mxu0 %v988
    %1231 = vmatpush2.msra.mxu0 %v987
    %1232 = vmatprep.subr.mxu0 %v986
    %1233 = vmatpush2.msra.mxu0 %v985
    %1234 = vmatprep.mubr.f32.mxu0 %v852
    %1235 = vmatmul.mubr.f32.gmra.mxu0 %v850
    %v1236 = vpop.f32.mrf.mxu0
    %v1237 = vadd.f32 %v1160, %v1236
    %v1238 = vpop.f32.mrf.mxu0
    %v1239 = vadd.f32 %v1162, %v1238
    %1240 = vmatprep.mubr.f32.mxu0 %v858
    %1241 = vmatmul.mubr.f32.gmra.mxu0 %v856
    %v1242 = vpop.f32.mrf.mxu0
    %v1243 = vadd.f32 %v1166, %v1242
    %v1244 = vpop.f32.mrf.mxu0
    %v1245 = vadd.f32 %v1168, %v1244
    %1246 = vdwg.mxu0
    %1247 = vmatprep.subr.mxu0 %v1048
    %1248 = vmatpush1.msra.mxu0 %v1047
    %1249 = vmatprep.subr.mxu0 %v1046
    %1250 = vmatpush1.msra.mxu0 %v1045
    %1251 = vmatprep.subr.mxu0 %v1044
    %1252 = vmatpush1.msra.mxu0 %v1043
    %1253 = vmatprep.subr.mxu0 %v1042
    %1254 = vmatpush1.msra.mxu0 %v1041
    %1255 = vmatprep.subr.mxu0 %v1040
    %1256 = vmatpush1.msra.mxu0 %v1039
    %1257 = vmatprep.subr.mxu0 %v1038
    %1258 = vmatpush1.msra.mxu0 %v1037
    %1259 = vmatprep.subr.mxu0 %v1036
    %1260 = vmatpush1.msra.mxu0 %v1035
    %1261 = vmatprep.subr.mxu0 %v1034
    %1262 = vmatpush1.msra.mxu0 %v1033
    %1263 = vmatprep.subr.mxu0 %v1032
    %1264 = vmatpush1.msra.mxu0 %v1031
    %1265 = vmatprep.subr.mxu0 %v1030
    %1266 = vmatpush1.msra.mxu0 %v1029
    %1267 = vmatprep.subr.mxu0 %v1028
    %1268 = vmatpush1.msra.mxu0 %v1027
    %1269 = vmatprep.subr.mxu0 %v1026
    %1270 = vmatpush1.msra.mxu0 %v1025
    %1271 = vmatprep.subr.mxu0 %v1024
    %1272 = vmatpush1.msra.mxu0 %v1023
    %1273 = vmatprep.subr.mxu0 %v1022
    %1274 = vmatpush1.msra.mxu0 %v1021
    %1275 = vmatprep.subr.mxu0 %v1020
    %1276 = vmatpush1.msra.mxu0 %v1019
    %1277 = vmatprep.subr.mxu0 %v1018
    %1278 = vmatpush1.msra.mxu0 %v1017
    %1279 = vmatprep.subr.mxu0 %v1080
    %1280 = vmatpush2.msra.mxu0 %v1079
    %1281 = vmatprep.subr.mxu0 %v1078
    %1282 = vmatpush2.msra.mxu0 %v1077
    %1283 = vmatprep.subr.mxu0 %v1076
    %1284 = vmatpush2.msra.mxu0 %v1075
    %1285 = vmatprep.subr.mxu0 %v1074
    %1286 = vmatpush2.msra.mxu0 %v1073
    %1287 = vmatprep.subr.mxu0 %v1072
    %1288 = vmatpush2.msra.mxu0 %v1071
    %1289 = vmatprep.subr.mxu0 %v1070
    %1290 = vmatpush2.msra.mxu0 %v1069
    %1291 = vmatprep.subr.mxu0 %v1068
    %1292 = vmatpush2.msra.mxu0 %v1067
    %1293 = vmatprep.subr.mxu0 %v1066
    %1294 = vmatpush2.msra.mxu0 %v1065
    %1295 = vmatprep.subr.mxu0 %v1064
    %1296 = vmatpush2.msra.mxu0 %v1063
    %1297 = vmatprep.subr.mxu0 %v1062
    %1298 = vmatpush2.msra.mxu0 %v1061
    %1299 = vmatprep.subr.mxu0 %v1060
    %1300 = vmatpush2.msra.mxu0 %v1059
    %1301 = vmatprep.subr.mxu0 %v1058
    %1302 = vmatpush2.msra.mxu0 %v1057
    %1303 = vmatprep.subr.mxu0 %v1056
    %1304 = vmatpush2.msra.mxu0 %v1055
    %1305 = vmatprep.subr.mxu0 %v1054
    %1306 = vmatpush2.msra.mxu0 %v1053
    %1307 = vmatprep.subr.mxu0 %v1052
    %1308 = vmatpush2.msra.mxu0 %v1051
    %1309 = vmatprep.subr.mxu0 %v1050
    %1310 = vmatpush2.msra.mxu0 %v1049
    %1311 = vmatprep.mubr.f32.mxu0 %v886
    %1312 = vmatmul.mubr.f32.gmra.mxu0 %v885
    %v1313 = vpop.f32.mrf.mxu0
    %v1314 = vadd.f32 %v1237, %v1313
    %v1315 = vpop.f32.mrf.mxu0
    %v1316 = vadd.f32 %v1239, %v1315
    %1317 = vmatprep.mubr.f32.mxu0 %v888
    %1318 = vmatmul.mubr.f32.gmra.mxu0 %v887
    %v1319 = vpop.f32.mrf.mxu0
    %v1320 = vadd.f32 %v1243, %v1319
    %v1321 = vpop.f32.mrf.mxu0
    %v1322 = vadd.f32 %v1245, %v1321
    %1323 = vdwg.mxu0
    %v1324 = vmax.f32 %v1314, 0.0
    %v1325 = vmax.f32 %v1316, 0.0
    %v1326 = vmax.f32 %v1320, 0.0
    %v1327 = vmax.f32 %v1322, 0.0
    %v1328 = vrot.slane %v1324, 7
    %v1329 = vrot.slane %v1325, 7
    %v1330 = vrot.slane %v1326, 7
    %v1331 = vrot.slane %v1327, 7
    %v1332 = vsel %vm412, %v1328, %v1330
    %v1333 = vsel %vm412, %v1329, %v1331
    %v1334 = vsel %vm412, %v1330, %v1328
    %v1335 = vsel %vm412, %v1331, %v1329
    %v1336 = vsel %vm419, %v1334, 0.0
    %v1337 = vsel %vm419, %v1335, 0.0
    %v1338 = vsel %vm420, %v1332, 0.0
    %v1339 = vsel %vm420, %v1333, 0.0
    %v1340 = vrot.slane %v1324, 1
    %v1341 = vrot.slane %v1325, 1
    %v1342 = vrot.slane %v1326, 1
    %v1343 = vrot.slane %v1327, 1
    %v1344 = vsel %vm876, %v1340, %v1342
    %v1345 = vsel %vm876, %v1341, %v1343
    %v1346 = vsel %vm876, %v1342, %v1340
    %v1347 = vsel %vm876, %v1343, %v1341
    %v1348 = vsel %vm883, %v1344, 0.0
    %v1349 = vsel %vm883, %v1345, 0.0
    %v1350 = vsel %vm884, %v1346, 0.0
    %v1351 = vsel %vm884, %v1347, 0.0
    %v1352 = vld [vmem:[#allocation10] sm:$0xff]
    %v1353 = vld [vmem:[#allocation10 + $0x8] sm:$0xff]
    %v1354 = vld [vmem:[#allocation10 + $0x10] sm:$0xff]
    %v1355 = vld [vmem:[#allocation10 + $0x18] sm:$0xff]
    %v1356 = vld [vmem:[#allocation10 + $0x20] sm:$0xff]
    %v1357 = vld [vmem:[#allocation10 + $0x28] sm:$0xff]
    %v1358 = vld [vmem:[#allocation10 + $0x30] sm:$0xff]
    %v1359 = vld [vmem:[#allocation10 + $0x38] sm:$0xff]
    %v1360 = vld [vmem:[#allocation10 + $0x40] sm:$0xff]
    %v1361 = vld [vmem:[#allocation10 + $0x48] sm:$0xff]
    %v1362 = vld [vmem:[#allocation10 + $0x50] sm:$0xff]
    %v1363 = vld [vmem:[#allocation10 + $0x58] sm:$0xff]
    %v1364 = vld [vmem:[#allocation10 + $0x60] sm:$0xff]
    %v1365 = vld [vmem:[#allocation10 + $0x68] sm:$0xff]
    %v1366 = vld [vmem:[#allocation10 + $0x70] sm:$0xff]
    %v1367 = vld [vmem:[#allocation10 + $0x78] sm:$0xff]
    %v1368 = vld [vmem:[#allocation10 + $0x80] sm:$0xff]
    %v1369 = vld [vmem:[#allocation10 + $0x88] sm:$0xff]
    %v1370 = vld [vmem:[#allocation10 + $0x90] sm:$0xff]
    %v1371 = vld [vmem:[#allocation10 + $0x98] sm:$0xff]
    %v1372 = vld [vmem:[#allocation10 + $0xa0] sm:$0xff]
    %v1373 = vld [vmem:[#allocation10 + $0xa8] sm:$0xff]
    %v1374 = vld [vmem:[#allocation10 + $0xb0] sm:$0xff]
    %v1375 = vld [vmem:[#allocation10 + $0xb8] sm:$0xff]
    %v1376 = vld [vmem:[#allocation10 + $0xc0] sm:$0xff]
    %v1377 = vld [vmem:[#allocation10 + $0xc8] sm:$0xff]
    %v1378 = vld [vmem:[#allocation10 + $0xd0] sm:$0xff]
    %v1379 = vld [vmem:[#allocation10 + $0xd8] sm:$0xff]
    %v1380 = vld [vmem:[#allocation10 + $0xe0] sm:$0xff]
    %v1381 = vld [vmem:[#allocation10 + $0xe8] sm:$0xff]
    %v1382 = vld [vmem:[#allocation10 + $0xf0] sm:$0xff]
    %v1383 = vld [vmem:[#allocation10 + $0xf8] sm:$0xff]
    %v1384 = vld [vmem:[#allocation10 + $0x100] sm:$0xff]
    %v1385 = vld [vmem:[#allocation10 + $0x108] sm:$0xff]
    %v1386 = vld [vmem:[#allocation10 + $0x110] sm:$0xff]
    %v1387 = vld [vmem:[#allocation10 + $0x118] sm:$0xff]
    %v1388 = vld [vmem:[#allocation10 + $0x120] sm:$0xff]
    %v1389 = vld [vmem:[#allocation10 + $0x128] sm:$0xff]
    %v1390 = vld [vmem:[#allocation10 + $0x130] sm:$0xff]
    %v1391 = vld [vmem:[#allocation10 + $0x138] sm:$0xff]
    %v1392 = vld [vmem:[#allocation10 + $0x140] sm:$0xff]
    %v1393 = vld [vmem:[#allocation10 + $0x148] sm:$0xff]
    %v1394 = vld [vmem:[#allocation10 + $0x150] sm:$0xff]
    %v1395 = vld [vmem:[#allocation10 + $0x158] sm:$0xff]
    %v1396 = vld [vmem:[#allocation10 + $0x160] sm:$0xff]
    %v1397 = vld [vmem:[#allocation10 + $0x168] sm:$0xff]
    %v1398 = vld [vmem:[#allocation10 + $0x170] sm:$0xff]
    %v1399 = vld [vmem:[#allocation10 + $0x178] sm:$0xff]
    %v1400 = vld [vmem:[#allocation10 + $0x180] sm:$0xff]
    %v1401 = vld [vmem:[#allocation10 + $0x188] sm:$0xff]
    %v1402 = vld [vmem:[#allocation10 + $0x190] sm:$0xff]
    %v1403 = vld [vmem:[#allocation10 + $0x198] sm:$0xff]
    %v1404 = vld [vmem:[#allocation10 + $0x1a0] sm:$0xff]
    %v1405 = vld [vmem:[#allocation10 + $0x1a8] sm:$0xff]
    %v1406 = vld [vmem:[#allocation10 + $0x1b0] sm:$0xff]
    %v1407 = vld [vmem:[#allocation10 + $0x1b8] sm:$0xff]
    %v1408 = vld [vmem:[#allocation10 + $0x1c0] sm:$0xff]
    %v1409 = vld [vmem:[#allocation10 + $0x1c8] sm:$0xff]
    %v1410 = vld [vmem:[#allocation10 + $0x1d0] sm:$0xff]
    %v1411 = vld [vmem:[#allocation10 + $0x1d8] sm:$0xff]
    %v1412 = vld [vmem:[#allocation10 + $0x1e0] sm:$0xff]
    %v1413 = vld [vmem:[#allocation10 + $0x1e8] sm:$0xff]
    %v1414 = vld [vmem:[#allocation10 + $0x1f0] sm:$0xff]
    %v1415 = vld [vmem:[#allocation10 + $0x1f8] sm:$0xff]
    %v1416 = vld [vmem:[#allocation10 + $0x200] sm:$0xff]
    %v1417 = vld [vmem:[#allocation10 + $0x208] sm:$0xff]
    %v1418 = vld [vmem:[#allocation10 + $0x210] sm:$0xff]
    %v1419 = vld [vmem:[#allocation10 + $0x218] sm:$0xff]
    %v1420 = vld [vmem:[#allocation10 + $0x220] sm:$0xff]
    %v1421 = vld [vmem:[#allocation10 + $0x228] sm:$0xff]
    %v1422 = vld [vmem:[#allocation10 + $0x230] sm:$0xff]
    %v1423 = vld [vmem:[#allocation10 + $0x238] sm:$0xff]
    %v1424 = vld [vmem:[#allocation10 + $0x240] sm:$0xff]
    %v1425 = vld [vmem:[#allocation10 + $0x248] sm:$0xff]
    %v1426 = vld [vmem:[#allocation10 + $0x250] sm:$0xff]
    %v1427 = vld [vmem:[#allocation10 + $0x258] sm:$0xff]
    %v1428 = vld [vmem:[#allocation10 + $0x260] sm:$0xff]
    %v1429 = vld [vmem:[#allocation10 + $0x268] sm:$0xff]
    %v1430 = vld [vmem:[#allocation10 + $0x270] sm:$0xff]
    %v1431 = vld [vmem:[#allocation10 + $0x278] sm:$0xff]
    %v1432 = vld [vmem:[#allocation10 + $0x280] sm:$0xff]
    %v1433 = vld [vmem:[#allocation10 + $0x288] sm:$0xff]
    %v1434 = vld [vmem:[#allocation10 + $0x290] sm:$0xff]
    %v1435 = vld [vmem:[#allocation10 + $0x298] sm:$0xff]
    %v1436 = vld [vmem:[#allocation10 + $0x2a0] sm:$0xff]
    %v1437 = vld [vmem:[#allocation10 + $0x2a8] sm:$0xff]
    %v1438 = vld [vmem:[#allocation10 + $0x2b0] sm:$0xff]
    %v1439 = vld [vmem:[#allocation10 + $0x2b8] sm:$0xff]
    %v1440 = vld [vmem:[#allocation10 + $0x2c0] sm:$0xff]
    %v1441 = vld [vmem:[#allocation10 + $0x2c8] sm:$0xff]
    %v1442 = vld [vmem:[#allocation10 + $0x2d0] sm:$0xff]
    %v1443 = vld [vmem:[#allocation10 + $0x2d8] sm:$0xff]
    %v1444 = vld [vmem:[#allocation10 + $0x2e0] sm:$0xff]
    %v1445 = vld [vmem:[#allocation10 + $0x2e8] sm:$0xff]
    %v1446 = vld [vmem:[#allocation10 + $0x2f0] sm:$0xff]
    %v1447 = vld [vmem:[#allocation10 + $0x2f8] sm:$0xff]
    %v1448 = vld [vmem:[#allocation10 + $0x300] sm:$0xff]
    %v1449 = vld [vmem:[#allocation10 + $0x308] sm:$0xff]
    %v1450 = vld [vmem:[#allocation10 + $0x310] sm:$0xff]
    %v1451 = vld [vmem:[#allocation10 + $0x318] sm:$0xff]
    %v1452 = vld [vmem:[#allocation10 + $0x320] sm:$0xff]
    %v1453 = vld [vmem:[#allocation10 + $0x328] sm:$0xff]
    %v1454 = vld [vmem:[#allocation10 + $0x330] sm:$0xff]
    %v1455 = vld [vmem:[#allocation10 + $0x338] sm:$0xff]
    %v1456 = vld [vmem:[#allocation10 + $0x340] sm:$0xff]
    %v1457 = vld [vmem:[#allocation10 + $0x348] sm:$0xff]
    %v1458 = vld [vmem:[#allocation10 + $0x350] sm:$0xff]
    %v1459 = vld [vmem:[#allocation10 + $0x358] sm:$0xff]
    %v1460 = vld [vmem:[#allocation10 + $0x360] sm:$0xff]
    %v1461 = vld [vmem:[#allocation10 + $0x368] sm:$0xff]
    %v1462 = vld [vmem:[#allocation10 + $0x370] sm:$0xff]
    %v1463 = vld [vmem:[#allocation10 + $0x378] sm:$0xff]
    %v1464 = vld [vmem:[#allocation10 + $0x380] sm:$0xff]
    %v1465 = vld [vmem:[#allocation10 + $0x388] sm:$0xff]
    %v1466 = vld [vmem:[#allocation10 + $0x390] sm:$0xff]
    %v1467 = vld [vmem:[#allocation10 + $0x398] sm:$0xff]
    %v1468 = vld [vmem:[#allocation10 + $0x3a0] sm:$0xff]
    %v1469 = vld [vmem:[#allocation10 + $0x3a8] sm:$0xff]
    %v1470 = vld [vmem:[#allocation10 + $0x3b0] sm:$0xff]
    %v1471 = vld [vmem:[#allocation10 + $0x3b8] sm:$0xff]
    %v1472 = vld [vmem:[#allocation10 + $0x3c0] sm:$0xff]
    %v1473 = vld [vmem:[#allocation10 + $0x3c8] sm:$0xff]
    %v1474 = vld [vmem:[#allocation10 + $0x3d0] sm:$0xff]
    %v1475 = vld [vmem:[#allocation10 + $0x3d8] sm:$0xff]
    %v1476 = vld [vmem:[#allocation10 + $0x3e0] sm:$0xff]
    %v1477 = vld [vmem:[#allocation10 + $0x3e8] sm:$0xff]
    %v1478 = vld [vmem:[#allocation10 + $0x3f0] sm:$0xff]
    %v1479 = vld [vmem:[#allocation10 + $0x3f8] sm:$0xff]
    %v1480 = vld [vmem:[#allocation10 + $0x400] sm:$0xff]
    %v1481 = vld [vmem:[#allocation10 + $0x408] sm:$0xff]
    %v1482 = vld [vmem:[#allocation10 + $0x410] sm:$0xff]
    %v1483 = vld [vmem:[#allocation10 + $0x418] sm:$0xff]
    %v1484 = vld [vmem:[#allocation10 + $0x420] sm:$0xff]
    %v1485 = vld [vmem:[#allocation10 + $0x428] sm:$0xff]
    %v1486 = vld [vmem:[#allocation10 + $0x430] sm:$0xff]
    %v1487 = vld [vmem:[#allocation10 + $0x438] sm:$0xff]
    %v1488 = vld [vmem:[#allocation10 + $0x440] sm:$0xff]
    %v1489 = vld [vmem:[#allocation10 + $0x448] sm:$0xff]
    %v1490 = vld [vmem:[#allocation10 + $0x450] sm:$0xff]
    %v1491 = vld [vmem:[#allocation10 + $0x458] sm:$0xff]
    %v1492 = vld [vmem:[#allocation10 + $0x460] sm:$0xff]
    %v1493 = vld [vmem:[#allocation10 + $0x468] sm:$0xff]
    %v1494 = vld [vmem:[#allocation10 + $0x470] sm:$0xff]
    %v1495 = vld [vmem:[#allocation10 + $0x478] sm:$0xff]
    %v1496 = vld [vmem:[#allocation10 + $0x480] sm:$0xff]
    %v1497 = vld [vmem:[#allocation10 + $0x488] sm:$0xff]
    %v1498 = vld [vmem:[#allocation10 + $0x490] sm:$0xff]
    %v1499 = vld [vmem:[#allocation10 + $0x498] sm:$0xff]
    %v1500 = vld [vmem:[#allocation10 + $0x4a0] sm:$0xff]
    %v1501 = vld [vmem:[#allocation10 + $0x4a8] sm:$0xff]
    %v1502 = vld [vmem:[#allocation10 + $0x4b0] sm:$0xff]
    %v1503 = vld [vmem:[#allocation10 + $0x4b8] sm:$0xff]
    %v1504 = vld [vmem:[#allocation10 + $0x4c0] sm:$0xff]
    %v1505 = vld [vmem:[#allocation10 + $0x4c8] sm:$0xff]
    %v1506 = vld [vmem:[#allocation10 + $0x4d0] sm:$0xff]
    %v1507 = vld [vmem:[#allocation10 + $0x4d8] sm:$0xff]
    %v1508 = vld [vmem:[#allocation10 + $0x4e0] sm:$0xff]
    %v1509 = vld [vmem:[#allocation10 + $0x4e8] sm:$0xff]
    %v1510 = vld [vmem:[#allocation10 + $0x4f0] sm:$0xff]
    %v1511 = vld [vmem:[#allocation10 + $0x4f8] sm:$0xff]
    %v1512 = vld [vmem:[#allocation10 + $0x500] sm:$0xff]
    %v1513 = vld [vmem:[#allocation10 + $0x508] sm:$0xff]
    %v1514 = vld [vmem:[#allocation10 + $0x510] sm:$0xff]
    %v1515 = vld [vmem:[#allocation10 + $0x518] sm:$0xff]
    %v1516 = vld [vmem:[#allocation10 + $0x520] sm:$0xff]
    %v1517 = vld [vmem:[#allocation10 + $0x528] sm:$0xff]
    %v1518 = vld [vmem:[#allocation10 + $0x530] sm:$0xff]
    %v1519 = vld [vmem:[#allocation10 + $0x538] sm:$0xff]
    %v1520 = vld [vmem:[#allocation10 + $0x540] sm:$0xff]
    %v1521 = vld [vmem:[#allocation10 + $0x548] sm:$0xff]
    %v1522 = vld [vmem:[#allocation10 + $0x550] sm:$0xff]
    %v1523 = vld [vmem:[#allocation10 + $0x558] sm:$0xff]
    %v1524 = vld [vmem:[#allocation10 + $0x560] sm:$0xff]
    %v1525 = vld [vmem:[#allocation10 + $0x568] sm:$0xff]
    %v1526 = vld [vmem:[#allocation10 + $0x570] sm:$0xff]
    %v1527 = vld [vmem:[#allocation10 + $0x578] sm:$0xff]
    %v1528 = vld [vmem:[#allocation10 + $0x580] sm:$0xff]
    %v1529 = vld [vmem:[#allocation10 + $0x588] sm:$0xff]
    %v1530 = vld [vmem:[#allocation10 + $0x590] sm:$0xff]
    %v1531 = vld [vmem:[#allocation10 + $0x598] sm:$0xff]
    %v1532 = vld [vmem:[#allocation10 + $0x5a0] sm:$0xff]
    %v1533 = vld [vmem:[#allocation10 + $0x5a8] sm:$0xff]
    %v1534 = vld [vmem:[#allocation10 + $0x5b0] sm:$0xff]
    %v1535 = vld [vmem:[#allocation10 + $0x5b8] sm:$0xff]
    %v1536 = vld [vmem:[#allocation10 + $0x5c0] sm:$0xff]
    %v1537 = vld [vmem:[#allocation10 + $0x5c8] sm:$0xff]
    %v1538 = vld [vmem:[#allocation10 + $0x5d0] sm:$0xff]
    %v1539 = vld [vmem:[#allocation10 + $0x5d8] sm:$0xff]
    %v1540 = vld [vmem:[#allocation10 + $0x5e0] sm:$0xff]
    %v1541 = vld [vmem:[#allocation10 + $0x5e8] sm:$0xff]
    %v1542 = vld [vmem:[#allocation10 + $0x5f0] sm:$0xff]
    %v1543 = vld [vmem:[#allocation10 + $0x5f8] sm:$0xff]
    %v1544 = vld [vmem:[#allocation11] sm:$0x3]
    %v1546 = vlaneseq
    %v1547 = vshrl.u32 %v1546, 7
    %v1548 = vsub.s32 0, %v1547
    %v1549 = vrot.slane %v1544, %v1548
    %v1550 = vlaneseq
    %v1551 = vshrl.u32 %v1550, 7
    %v1552 = vsub.s32 1, %v1551
    %v1553 = vrot.slane %v1544, %v1552
    %1556 = vmatprep.subr.mxu0 %v1383
    %1557 = vmatpush1.msra.mxu0 %v1382
    %1558 = vmatprep.subr.mxu0 %v1381
    %1559 = vmatpush1.msra.mxu0 %v1380
    %1560 = vmatprep.subr.mxu0 %v1379
    %1561 = vmatpush1.msra.mxu0 %v1378
    %1562 = vmatprep.subr.mxu0 %v1377
    %1563 = vmatpush1.msra.mxu0 %v1376
    %1564 = vmatprep.subr.mxu0 %v1375
    %1565 = vmatpush1.msra.mxu0 %v1374
    %1566 = vmatprep.subr.mxu0 %v1373
    %1567 = vmatpush1.msra.mxu0 %v1372
    %1568 = vmatprep.subr.mxu0 %v1371
    %1569 = vmatpush1.msra.mxu0 %v1370
    %1570 = vmatprep.subr.mxu0 %v1369
    %1571 = vmatpush1.msra.mxu0 %v1368
    %1572 = vmatprep.subr.mxu0 %v1367
    %1573 = vmatpush1.msra.mxu0 %v1366
    %1574 = vmatprep.subr.mxu0 %v1365
    %1575 = vmatpush1.msra.mxu0 %v1364
    %1576 = vmatprep.subr.mxu0 %v1363
    %1577 = vmatpush1.msra.mxu0 %v1362
    %1578 = vmatprep.subr.mxu0 %v1361
    %1579 = vmatpush1.msra.mxu0 %v1360
    %1580 = vmatprep.subr.mxu0 %v1359
    %1581 = vmatpush1.msra.mxu0 %v1358
    %1582 = vmatprep.subr.mxu0 %v1357
    %1583 = vmatpush1.msra.mxu0 %v1356
    %1584 = vmatprep.subr.mxu0 %v1355
    %1585 = vmatpush1.msra.mxu0 %v1354
    %1586 = vmatprep.subr.mxu0 %v1353
    %1587 = vmatpush1.msra.mxu0 %v1352
    %1588 = vmatprep.subr.mxu0 %v1415
    %1589 = vmatpush2.msra.mxu0 %v1414
    %1590 = vmatprep.subr.mxu0 %v1413
    %1591 = vmatpush2.msra.mxu0 %v1412
    %1592 = vmatprep.subr.mxu0 %v1411
    %1593 = vmatpush2.msra.mxu0 %v1410
    %1594 = vmatprep.subr.mxu0 %v1409
    %1595 = vmatpush2.msra.mxu0 %v1408
    %1596 = vmatprep.subr.mxu0 %v1407
    %1597 = vmatpush2.msra.mxu0 %v1406
    %1598 = vmatprep.subr.mxu0 %v1405
    %1599 = vmatpush2.msra.mxu0 %v1404
    %1600 = vmatprep.subr.mxu0 %v1403
    %1601 = vmatpush2.msra.mxu0 %v1402
    %1602 = vmatprep.subr.mxu0 %v1401
    %1603 = vmatpush2.msra.mxu0 %v1400
    %1604 = vmatprep.subr.mxu0 %v1399
    %1605 = vmatpush2.msra.mxu0 %v1398
    %1606 = vmatprep.subr.mxu0 %v1397
    %1607 = vmatpush2.msra.mxu0 %v1396
    %1608 = vmatprep.subr.mxu0 %v1395
    %1609 = vmatpush2.msra.mxu0 %v1394
    %1610 = vmatprep.subr.mxu0 %v1393
    %1611 = vmatpush2.msra.mxu0 %v1392
    %1612 = vmatprep.subr.mxu0 %v1391
    %1613 = vmatpush2.msra.mxu0 %v1390
    %1614 = vmatprep.subr.mxu0 %v1389
    %1615 = vmatpush2.msra.mxu0 %v1388
    %1616 = vmatprep.subr.mxu0 %v1387
    %1617 = vmatpush2.msra.mxu0 %v1386
    %1618 = vmatprep.subr.mxu0 %v1385
    %1619 = vmatpush2.msra.mxu0 %v1384
    %1620 = vmatprep.mubr.f32.mxu0 %v1337
    %1621 = vmatmul.mubr.f32.gmra.mxu0 %v1336
    %v1622 = vpop.f32.mrf.mxu0
    %v1623 = vadd.f32 %v1549, %v1622
    %v1624 = vpop.f32.mrf.mxu0
    %v1625 = vadd.f32 %v1553, %v1624
    %1626 = vmatprep.mubr.f32.mxu0 %v1339
    %1627 = vmatmul.mubr.f32.gmra.mxu0 %v1338
    %v1628 = vpop.f32.mrf.mxu0
    %v1629 = vadd.f32 %v1549, %v1628
    %v1630 = vpop.f32.mrf.mxu0
    %v1631 = vadd.f32 %v1553, %v1630
    %1632 = vdwg.mxu0
    %1633 = vmatprep.subr.mxu0 %v1447
    %1634 = vmatpush1.msra.mxu0 %v1446
    %1635 = vmatprep.subr.mxu0 %v1445
    %1636 = vmatpush1.msra.mxu0 %v1444
    %1637 = vmatprep.subr.mxu0 %v1443
    %1638 = vmatpush1.msra.mxu0 %v1442
    %1639 = vmatprep.subr.mxu0 %v1441
    %1640 = vmatpush1.msra.mxu0 %v1440
    %1641 = vmatprep.subr.mxu0 %v1439
    %1642 = vmatpush1.msra.mxu0 %v1438
    %1643 = vmatprep.subr.mxu0 %v1437
    %1644 = vmatpush1.msra.mxu0 %v1436
    %1645 = vmatprep.subr.mxu0 %v1435
    %1646 = vmatpush1.msra.mxu0 %v1434
    %1647 = vmatprep.subr.mxu0 %v1433
    %1648 = vmatpush1.msra.mxu0 %v1432
    %1649 = vmatprep.subr.mxu0 %v1431
    %1650 = vmatpush1.msra.mxu0 %v1430
    %1651 = vmatprep.subr.mxu0 %v1429
    %1652 = vmatpush1.msra.mxu0 %v1428
    %1653 = vmatprep.subr.mxu0 %v1427
    %1654 = vmatpush1.msra.mxu0 %v1426
    %1655 = vmatprep.subr.mxu0 %v1425
    %1656 = vmatpush1.msra.mxu0 %v1424
    %1657 = vmatprep.subr.mxu0 %v1423
    %1658 = vmatpush1.msra.mxu0 %v1422
    %1659 = vmatprep.subr.mxu0 %v1421
    %1660 = vmatpush1.msra.mxu0 %v1420
    %1661 = vmatprep.subr.mxu0 %v1419
    %1662 = vmatpush1.msra.mxu0 %v1418
    %1663 = vmatprep.subr.mxu0 %v1417
    %1664 = vmatpush1.msra.mxu0 %v1416
    %1665 = vmatprep.subr.mxu0 %v1479
    %1666 = vmatpush2.msra.mxu0 %v1478
    %1667 = vmatprep.subr.mxu0 %v1477
    %1668 = vmatpush2.msra.mxu0 %v1476
    %1669 = vmatprep.subr.mxu0 %v1475
    %1670 = vmatpush2.msra.mxu0 %v1474
    %1671 = vmatprep.subr.mxu0 %v1473
    %1672 = vmatpush2.msra.mxu0 %v1472
    %1673 = vmatprep.subr.mxu0 %v1471
    %1674 = vmatpush2.msra.mxu0 %v1470
    %1675 = vmatprep.subr.mxu0 %v1469
    %1676 = vmatpush2.msra.mxu0 %v1468
    %1677 = vmatprep.subr.mxu0 %v1467
    %1678 = vmatpush2.msra.mxu0 %v1466
    %1679 = vmatprep.subr.mxu0 %v1465
    %1680 = vmatpush2.msra.mxu0 %v1464
    %1681 = vmatprep.subr.mxu0 %v1463
    %1682 = vmatpush2.msra.mxu0 %v1462
    %1683 = vmatprep.subr.mxu0 %v1461
    %1684 = vmatpush2.msra.mxu0 %v1460
    %1685 = vmatprep.subr.mxu0 %v1459
    %1686 = vmatpush2.msra.mxu0 %v1458
    %1687 = vmatprep.subr.mxu0 %v1457
    %1688 = vmatpush2.msra.mxu0 %v1456
    %1689 = vmatprep.subr.mxu0 %v1455
    %1690 = vmatpush2.msra.mxu0 %v1454
    %1691 = vmatprep.subr.mxu0 %v1453
    %1692 = vmatpush2.msra.mxu0 %v1452
    %1693 = vmatprep.subr.mxu0 %v1451
    %1694 = vmatpush2.msra.mxu0 %v1450
    %1695 = vmatprep.subr.mxu0 %v1449
    %1696 = vmatpush2.msra.mxu0 %v1448
    %1697 = vmatprep.mubr.f32.mxu0 %v1325
    %1698 = vmatmul.mubr.f32.gmra.mxu0 %v1324
    %v1699 = vpop.f32.mrf.mxu0
    %v1700 = vadd.f32 %v1623, %v1699
    %v1701 = vpop.f32.mrf.mxu0
    %v1702 = vadd.f32 %v1625, %v1701
    %1703 = vmatprep.mubr.f32.mxu0 %v1327
    %1704 = vmatmul.mubr.f32.gmra.mxu0 %v1326
    %v1705 = vpop.f32.mrf.mxu0
    %v1706 = vadd.f32 %v1629, %v1705
    %v1707 = vpop.f32.mrf.mxu0
    %v1708 = vadd.f32 %v1631, %v1707
    %1709 = vdwg.mxu0
    %1710 = vmatprep.subr.mxu0 %v1511
    %1711 = vmatpush1.msra.mxu0 %v1510
    %1712 = vmatprep.subr.mxu0 %v1509
    %1713 = vmatpush1.msra.mxu0 %v1508
    %1714 = vmatprep.subr.mxu0 %v1507
    %1715 = vmatpush1.msra.mxu0 %v1506
    %1716 = vmatprep.subr.mxu0 %v1505
    %1717 = vmatpush1.msra.mxu0 %v1504
    %1718 = vmatprep.subr.mxu0 %v1503
    %1719 = vmatpush1.msra.mxu0 %v1502
    %1720 = vmatprep.subr.mxu0 %v1501
    %1721 = vmatpush1.msra.mxu0 %v1500
    %1722 = vmatprep.subr.mxu0 %v1499
    %1723 = vmatpush1.msra.mxu0 %v1498
    %1724 = vmatprep.subr.mxu0 %v1497
    %1725 = vmatpush1.msra.mxu0 %v1496
    %1726 = vmatprep.subr.mxu0 %v1495
    %1727 = vmatpush1.msra.mxu0 %v1494
    %1728 = vmatprep.subr.mxu0 %v1493
    %1729 = vmatpush1.msra.mxu0 %v1492
    %1730 = vmatprep.subr.mxu0 %v1491
    %1731 = vmatpush1.msra.mxu0 %v1490
    %1732 = vmatprep.subr.mxu0 %v1489
    %1733 = vmatpush1.msra.mxu0 %v1488
    %1734 = vmatprep.subr.mxu0 %v1487
    %1735 = vmatpush1.msra.mxu0 %v1486
    %1736 = vmatprep.subr.mxu0 %v1485
    %1737 = vmatpush1.msra.mxu0 %v1484
    %1738 = vmatprep.subr.mxu0 %v1483
    %1739 = vmatpush1.msra.mxu0 %v1482
    %1740 = vmatprep.subr.mxu0 %v1481
    %1741 = vmatpush1.msra.mxu0 %v1480
    %1742 = vmatprep.subr.mxu0 %v1543
    %1743 = vmatpush2.msra.mxu0 %v1542
    %1744 = vmatprep.subr.mxu0 %v1541
    %1745 = vmatpush2.msra.mxu0 %v1540
    %1746 = vmatprep.subr.mxu0 %v1539
    %1747 = vmatpush2.msra.mxu0 %v1538
    %1748 = vmatprep.subr.mxu0 %v1537
    %1749 = vmatpush2.msra.mxu0 %v1536
    %1750 = vmatprep.subr.mxu0 %v1535
    %1751 = vmatpush2.msra.mxu0 %v1534
    %1752 = vmatprep.subr.mxu0 %v1533
    %1753 = vmatpush2.msra.mxu0 %v1532
    %1754 = vmatprep.subr.mxu0 %v1531
    %1755 = vmatpush2.msra.mxu0 %v1530
    %1756 = vmatprep.subr.mxu0 %v1529
    %1757 = vmatpush2.msra.mxu0 %v1528
    %1758 = vmatprep.subr.mxu0 %v1527
    %1759 = vmatpush2.msra.mxu0 %v1526
    %1760 = vmatprep.subr.mxu0 %v1525
    %1761 = vmatpush2.msra.mxu0 %v1524
    %1762 = vmatprep.subr.mxu0 %v1523
    %1763 = vmatpush2.msra.mxu0 %v1522
    %1764 = vmatprep.subr.mxu0 %v1521
    %1765 = vmatpush2.msra.mxu0 %v1520
    %1766 = vmatprep.subr.mxu0 %v1519
    %1767 = vmatpush2.msra.mxu0 %v1518
    %1768 = vmatprep.subr.mxu0 %v1517
    %1769 = vmatpush2.msra.mxu0 %v1516
    %1770 = vmatprep.subr.mxu0 %v1515
    %1771 = vmatpush2.msra.mxu0 %v1514
    %1772 = vmatprep.subr.mxu0 %v1513
    %1773 = vmatpush2.msra.mxu0 %v1512
    %1774 = vmatprep.mubr.f32.mxu0 %v1349
    %1775 = vmatmul.mubr.f32.gmra.mxu0 %v1348
    %v1776 = vpop.f32.mrf.mxu0
    %v1777 = vadd.f32 %v1700, %v1776
    %v1778 = vpop.f32.mrf.mxu0
    %v1779 = vadd.f32 %v1702, %v1778
    %1780 = vmatprep.mubr.f32.mxu0 %v1351
    %1781 = vmatmul.mubr.f32.gmra.mxu0 %v1350
    %v1782 = vpop.f32.mrf.mxu0
    %v1783 = vadd.f32 %v1706, %v1782
    %v1784 = vpop.f32.mrf.mxu0
    %v1785 = vadd.f32 %v1708, %v1784
    %1786 = vdwg.mxu0
    %v1787 = vadd.f32 %v1777, %v850
    %v1788 = vadd.f32 %v1779, %v852
    %v1789 = vadd.f32 %v1783, %v856
    %v1790 = vadd.f32 %v1785, %v858
    %v1791 = vmax.f32 %v1787, 0.0
    %v1792 = vmax.f32 %v1788, 0.0
    %v1793 = vmax.f32 %v1789, 0.0
    %v1794 = vmax.f32 %v1790, 0.0
    %v1795 = vrot.slane %v1791, 4
    %v1796 = vadd.f32 %v1791, %v1795
    %v1797 = vrot.slane %v1796, 2
    %v1798 = vadd.f32 %v1796, %v1797
    %v1799 = vrot.slane %v1798, 1
    %v1800 = vadd.f32 %v1798, %v1799
    %v1801 = vrot.slane %v1792, 4
    %v1802 = vadd.f32 %v1792, %v1801
    %v1803 = vrot.slane %v1802, 2
    %v1804 = vadd.f32 %v1802, %v1803
    %v1805 = vrot.slane %v1804, 1
    %v1806 = vadd.f32 %v1804, %v1805
    %v1807 = vrot.slane %v1793, 4
    %v1808 = vadd.f32 %v1793, %v1807
    %v1809 = vrot.slane %v1808, 2
    %v1810 = vadd.f32 %v1808, %v1809
    %v1811 = vrot.slane %v1810, 1
    %v1812 = vadd.f32 %v1810, %v1811
    %v1813 = vrot.slane %v1794, 4
    %v1814 = vadd.f32 %v1794, %v1813
    %v1815 = vrot.slane %v1814, 2
    %v1816 = vadd.f32 %v1814, %v1815
    %v1817 = vrot.slane %v1816, 1
    %v1818 = vadd.f32 %v1816, %v1817
    %v1819 = vld [vmem:[%s9] sm:$0xff]
    %v1820 = vld [vmem:[%s9 + $0x8] sm:$0xff]
    %v1821 = vld [vmem:[%s9 + $0x10] sm:$0xff]
    %v1822 = vld [vmem:[%s9 + $0x18] sm:$0xff]
    %v1823 = vld [vmem:[%s9 + $0x20] sm:$0xff]
    %v1824 = vld [vmem:[%s9 + $0x28] sm:$0xff]
    %v1825 = vld [vmem:[%s9 + $0x30] sm:$0xff]
    %v1826 = vld [vmem:[%s9 + $0x38] sm:$0xff]
    %v1827 = vld [vmem:[%s9 + $0x40] sm:$0xff]
    %v1828 = vld [vmem:[%s9 + $0x48] sm:$0xff]
    %v1829 = vld [vmem:[%s9 + $0x50] sm:$0xff]
    %v1830 = vld [vmem:[%s9 + $0x58] sm:$0xff]
    %v1831 = vld [vmem:[%s9 + $0x60] sm:$0xff]
    %v1832 = vld [vmem:[%s9 + $0x68] sm:$0xff]
    %v1833 = vld [vmem:[%s9 + $0x70] sm:$0xff]
    %v1834 = vld [vmem:[%s9 + $0x78] sm:$0xff]
    %v1835 = vld [vmem:[%s9 + $0x80] sm:$0xff]
    %v1836 = vld [vmem:[%s9 + $0x88] sm:$0xff]
    %v1837 = vld [vmem:[%s9 + $0x90] sm:$0xff]
    %v1838 = vld [vmem:[%s9 + $0x98] sm:$0xff]
    %v1839 = vld [vmem:[%s9 + $0xa0] sm:$0xff]
    %v1840 = vld [vmem:[%s9 + $0xa8] sm:$0xff]
    %v1841 = vld [vmem:[%s9 + $0xb0] sm:$0xff]
    %v1842 = vld [vmem:[%s9 + $0xb8] sm:$0xff]
    %v1843 = vld [vmem:[%s9 + $0xc0] sm:$0xff]
    %v1844 = vld [vmem:[%s9 + $0xc8] sm:$0xff]
    %v1845 = vld [vmem:[%s9 + $0xd0] sm:$0xff]
    %v1846 = vld [vmem:[%s9 + $0xd8] sm:$0xff]
    %v1847 = vld [vmem:[%s9 + $0xe0] sm:$0xff]
    %v1848 = vld [vmem:[%s9 + $0xe8] sm:$0xff]
    %v1849 = vld [vmem:[%s9 + $0xf0] sm:$0xff]
    %v1850 = vld [vmem:[%s9 + $0xf8] sm:$0xff]
    %v1851 = vld [vmem:[%s9 + $0x100] sm:$0xff]
    %v1852 = vld [vmem:[%s9 + $0x108] sm:$0xff]
    %v1853 = vld [vmem:[%s9 + $0x110] sm:$0xff]
    %v1854 = vld [vmem:[%s9 + $0x118] sm:$0xff]
    %v1855 = vld [vmem:[%s9 + $0x120] sm:$0xff]
    %v1856 = vld [vmem:[%s9 + $0x128] sm:$0xff]
    %v1857 = vld [vmem:[%s9 + $0x130] sm:$0xff]
    %v1858 = vld [vmem:[%s9 + $0x138] sm:$0xff]
    %v1859 = vld [vmem:[%s9 + $0x140] sm:$0xff]
    %v1860 = vld [vmem:[%s9 + $0x148] sm:$0xff]
    %v1861 = vld [vmem:[%s9 + $0x150] sm:$0xff]
    %v1862 = vld [vmem:[%s9 + $0x158] sm:$0xff]
    %v1863 = vld [vmem:[%s9 + $0x160] sm:$0xff]
    %v1864 = vld [vmem:[%s9 + $0x168] sm:$0xff]
    %v1865 = vld [vmem:[%s9 + $0x170] sm:$0xff]
    %v1866 = vld [vmem:[%s9 + $0x178] sm:$0xff]
    %v1867 = vld [vmem:[%s9 + $0x180] sm:$0xff]
    %v1868 = vld [vmem:[%s9 + $0x188] sm:$0xff]
    %v1869 = vld [vmem:[%s9 + $0x190] sm:$0xff]
    %v1870 = vld [vmem:[%s9 + $0x198] sm:$0xff]
    %v1871 = vld [vmem:[%s9 + $0x1a0] sm:$0xff]
    %v1872 = vld [vmem:[%s9 + $0x1a8] sm:$0xff]
    %v1873 = vld [vmem:[%s9 + $0x1b0] sm:$0xff]
    %v1874 = vld [vmem:[%s9 + $0x1b8] sm:$0xff]
    %v1875 = vld [vmem:[%s9 + $0x1c0] sm:$0xff]
    %v1876 = vld [vmem:[%s9 + $0x1c8] sm:$0xff]
    %v1877 = vld [vmem:[%s9 + $0x1d0] sm:$0xff]
    %v1878 = vld [vmem:[%s9 + $0x1d8] sm:$0xff]
    %v1879 = vld [vmem:[%s9 + $0x1e0] sm:$0xff]
    %v1880 = vld [vmem:[%s9 + $0x1e8] sm:$0xff]
    %v1881 = vld [vmem:[%s9 + $0x1f0] sm:$0xff]
    %v1882 = vld [vmem:[%s9 + $0x1f8] sm:$0xff]
    %v1883 = vld [vmem:[#allocation13] sm:$0x3]
    %v1885 = vlaneseq
    %v1886 = vshrl.u32 %v1885, 7
    %v1887 = vsub.s32 0, %v1886
    %v1888 = vrot.slane %v1883, %v1887
    %v1889 = vlaneseq
    %v1890 = vshrl.u32 %v1889, 7
    %v1891 = vsub.s32 1, %v1890
    %v1892 = vrot.slane %v1883, %v1891
    %vm1899 = vcmask 1041409
    %v1900 = vsel %vm1899, %v1812, %v1800
    %v1901 = vsel %vm1899, %v1818, %v1806
    %1904 = vmatprep.subr.mxu0 %v1850
    %1905 = vmatpush1.msra.mxu0 %v1849
    %1906 = vmatprep.subr.mxu0 %v1848
    %1907 = vmatpush1.msra.mxu0 %v1847
    %1908 = vmatprep.subr.mxu0 %v1846
    %1909 = vmatpush1.msra.mxu0 %v1845
    %1910 = vmatprep.subr.mxu0 %v1844
    %1911 = vmatpush1.msra.mxu0 %v1843
    %1912 = vmatprep.subr.mxu0 %v1842
    %1913 = vmatpush1.msra.mxu0 %v1841
    %1914 = vmatprep.subr.mxu0 %v1840
    %1915 = vmatpush1.msra.mxu0 %v1839
    %1916 = vmatprep.subr.mxu0 %v1838
    %1917 = vmatpush1.msra.mxu0 %v1837
    %1918 = vmatprep.subr.mxu0 %v1836
    %1919 = vmatpush1.msra.mxu0 %v1835
    %1920 = vmatprep.subr.mxu0 %v1834
    %1921 = vmatpush1.msra.mxu0 %v1833
    %1922 = vmatprep.subr.mxu0 %v1832
    %1923 = vmatpush1.msra.mxu0 %v1831
    %1924 = vmatprep.subr.mxu0 %v1830
    %1925 = vmatpush1.msra.mxu0 %v1829
    %1926 = vmatprep.subr.mxu0 %v1828
    %1927 = vmatpush1.msra.mxu0 %v1827
    %1928 = vmatprep.subr.mxu0 %v1826
    %1929 = vmatpush1.msra.mxu0 %v1825
    %1930 = vmatprep.subr.mxu0 %v1824
    %1931 = vmatpush1.msra.mxu0 %v1823
    %1932 = vmatprep.subr.mxu0 %v1822
    %1933 = vmatpush1.msra.mxu0 %v1821
    %1934 = vmatprep.subr.mxu0 %v1820
    %1935 = vmatpush1.msra.mxu0 %v1819
    %1936 = vmatprep.subr.mxu0 %v1882
    %1937 = vmatpush2.msra.mxu0 %v1881
    %1938 = vmatprep.subr.mxu0 %v1880
    %1939 = vmatpush2.msra.mxu0 %v1879
    %1940 = vmatprep.subr.mxu0 %v1878
    %1941 = vmatpush2.msra.mxu0 %v1877
    %1942 = vmatprep.subr.mxu0 %v1876
    %1943 = vmatpush2.msra.mxu0 %v1875
    %1944 = vmatprep.subr.mxu0 %v1874
    %1945 = vmatpush2.msra.mxu0 %v1873
    %1946 = vmatprep.subr.mxu0 %v1872
    %1947 = vmatpush2.msra.mxu0 %v1871
    %1948 = vmatprep.subr.mxu0 %v1870
    %1949 = vmatpush2.msra.mxu0 %v1869
    %1950 = vmatprep.subr.mxu0 %v1868
    %1951 = vmatpush2.msra.mxu0 %v1867
    %1952 = vmatprep.subr.mxu0 %v1866
    %1953 = vmatpush2.msra.mxu0 %v1865
    %1954 = vmatprep.subr.mxu0 %v1864
    %1955 = vmatpush2.msra.mxu0 %v1863
    %1956 = vmatprep.subr.mxu0 %v1862
    %1957 = vmatpush2.msra.mxu0 %v1861
    %1958 = vmatprep.subr.mxu0 %v1860
    %1959 = vmatpush2.msra.mxu0 %v1859
    %1960 = vmatprep.subr.mxu0 %v1858
    %1961 = vmatpush2.msra.mxu0 %v1857
    %1962 = vmatprep.subr.mxu0 %v1856
    %1963 = vmatpush2.msra.mxu0 %v1855
    %1964 = vmatprep.subr.mxu0 %v1854
    %1965 = vmatpush2.msra.mxu0 %v1853
    %1966 = vmatprep.subr.mxu0 %v1852
    %1967 = vmatpush2.msra.mxu0 %v1851
    %1968 = vmatprep.mubr.f32.mxu0 %v1901
    %1969 = vmatmul.mubr.f32.gmra.mxu0 %v1900
    %v1970 = vpop.f32.mrf.mxu0
    %v1971 = vadd.f32 %v1888, %v1970
    %v1972 = vpop.f32.mrf.mxu0
    %v1973 = vadd.f32 %v1892, %v1972
    %1974 = vdwg.mxu0
    %v1975 = vmax.f32 %v1971, 0.0
    %v1976 = vmax.f32 %v1973, 0.0
    %v1977 = vld [vmem:[#allocation14] sm:$0xff]
    %v1978 = vld [vmem:[#allocation14 + $0x8] sm:$0xff]
    %v1979 = vld [vmem:[#allocation14 + $0x10] sm:$0xff]
    %v1980 = vld [vmem:[#allocation14 + $0x18] sm:$0xff]
    %v1981 = vld [vmem:[#allocation14 + $0x20] sm:$0xff]
    %v1982 = vld [vmem:[#allocation14 + $0x28] sm:$0xff]
    %v1983 = vld [vmem:[#allocation14 + $0x30] sm:$0xff]
    %v1984 = vld [vmem:[#allocation14 + $0x38] sm:$0xff]
    %v1985 = vld [vmem:[#allocation14 + $0x40] sm:$0xff]
    %v1986 = vld [vmem:[#allocation14 + $0x48] sm:$0xff]
    %v1987 = vld [vmem:[#allocation14 + $0x50] sm:$0xff]
    %v1988 = vld [vmem:[#allocation14 + $0x58] sm:$0xff]
    %v1989 = vld [vmem:[#allocation14 + $0x60] sm:$0xff]
    %v1990 = vld [vmem:[#allocation14 + $0x68] sm:$0xff]
    %v1991 = vld [vmem:[#allocation14 + $0x70] sm:$0xff]
    %v1992 = vld [vmem:[#allocation14 + $0x78] sm:$0xff]
    %v1993 = vld [vmem:[#allocation14 + $0x80] sm:$0xff]
    %v1994 = vld [vmem:[#allocation14 + $0x88] sm:$0xff]
    %v1995 = vld [vmem:[#allocation14 + $0x90] sm:$0xff]
    %v1996 = vld [vmem:[#allocation14 + $0x98] sm:$0xff]
    %v1997 = vld [vmem:[#allocation14 + $0xa0] sm:$0xff]
    %v1998 = vld [vmem:[#allocation14 + $0xa8] sm:$0xff]
    %v1999 = vld [vmem:[#allocation14 + $0xb0] sm:$0xff]
    %v2000 = vld [vmem:[#allocation14 + $0xb8] sm:$0xff]
    %v2001 = vld [vmem:[#allocation14 + $0xc0] sm:$0xff]
    %v2002 = vld [vmem:[#allocation14 + $0xc8] sm:$0xff]
    %v2003 = vld [vmem:[#allocation14 + $0xd0] sm:$0xff]
    %v2004 = vld [vmem:[#allocation14 + $0xd8] sm:$0xff]
    %v2005 = vld [vmem:[#allocation14 + $0xe0] sm:$0xff]
    %v2006 = vld [vmem:[#allocation14 + $0xe8] sm:$0xff]
    %v2007 = vld [vmem:[#allocation14 + $0xf0] sm:$0xff]
    %v2008 = vld [vmem:[#allocation14 + $0xf8] sm:$0xff]
    %v2009 = vld [vmem:[%s12] sm:$0x1]
    %v2011 = vlaneseq
    %v2012 = vshrl.u32 %v2011, 7
    %v2013 = vsub.s32 0, %v2012
    %v2014 = vrot.slane %v2009, %v2013
    %2016 = vmatprep.subr.mxu0 0.0
    %2017 = vmatpush1.msra.mxu0 %v1992
    %2018 = vmatprep.subr.mxu0 0.0
    %2019 = vmatpush1.msra.mxu0 %v1991
    %2020 = vmatprep.subr.mxu0 0.0
    %2021 = vmatpush1.msra.mxu0 %v1990
    %2022 = vmatprep.subr.mxu0 0.0
    %2023 = vmatpush1.msra.mxu0 %v1989
    %2024 = vmatprep.subr.mxu0 0.0
    %2025 = vmatpush1.msra.mxu0 %v1988
    %2026 = vmatprep.subr.mxu0 0.0
    %2027 = vmatpush1.msra.mxu0 %v1987
    %2028 = vmatprep.subr.mxu0 0.0
    %2029 = vmatpush1.msra.mxu0 %v1986
    %2030 = vmatprep.subr.mxu0 0.0
    %2031 = vmatpush1.msra.mxu0 %v1985
    %2032 = vmatprep.subr.mxu0 0.0
    %2033 = vmatpush1.msra.mxu0 %v1984
    %2034 = vmatprep.subr.mxu0 0.0
    %2035 = vmatpush1.msra.mxu0 %v1983
    %2036 = vmatprep.subr.mxu0 0.0
    %2037 = vmatpush1.msra.mxu0 %v1982
    %2038 = vmatprep.subr.mxu0 0.0
    %2039 = vmatpush1.msra.mxu0 %v1981
    %2040 = vmatprep.subr.mxu0 0.0
    %2041 = vmatpush1.msra.mxu0 %v1980
    %2042 = vmatprep.subr.mxu0 0.0
    %2043 = vmatpush1.msra.mxu0 %v1979
    %2044 = vmatprep.subr.mxu0 0.0
    %2045 = vmatpush1.msra.mxu0 %v1978
    %2046 = vmatprep.subr.mxu0 0.0
    %2047 = vmatpush1.msra.mxu0 %v1977
    %2048 = vmatprep.subr.mxu0 0.0
    %2049 = vmatpush2.msra.mxu0 %v2008
    %2050 = vmatprep.subr.mxu0 0.0
    %2051 = vmatpush2.msra.mxu0 %v2007
    %2052 = vmatprep.subr.mxu0 0.0
    %2053 = vmatpush2.msra.mxu0 %v2006
    %2054 = vmatprep.subr.mxu0 0.0
    %2055 = vmatpush2.msra.mxu0 %v2005
    %2056 = vmatprep.subr.mxu0 0.0
    %2057 = vmatpush2.msra.mxu0 %v2004
    %2058 = vmatprep.subr.mxu0 0.0
    %2059 = vmatpush2.msra.mxu0 %v2003
    %2060 = vmatprep.subr.mxu0 0.0
    %2061 = vmatpush2.msra.mxu0 %v2002
    %2062 = vmatprep.subr.mxu0 0.0
    %2063 = vmatpush2.msra.mxu0 %v2001
    %2064 = vmatprep.subr.mxu0 0.0
    %2065 = vmatpush2.msra.mxu0 %v2000
    %2066 = vmatprep.subr.mxu0 0.0
    %2067 = vmatpush2.msra.mxu0 %v1999
    %2068 = vmatprep.subr.mxu0 0.0
    %2069 = vmatpush2.msra.mxu0 %v1998
    %2070 = vmatprep.subr.mxu0 0.0
    %2071 = vmatpush2.msra.mxu0 %v1997
    %2072 = vmatprep.subr.mxu0 0.0
    %2073 = vmatpush2.msra.mxu0 %v1996
    %2074 = vmatprep.subr.mxu0 0.0
    %2075 = vmatpush2.msra.mxu0 %v1995
    %2076 = vmatprep.subr.mxu0 0.0
    %2077 = vmatpush2.msra.mxu0 %v1994
    %2078 = vmatprep.subr.mxu0 0.0
    %2079 = vmatpush2.msra.mxu0 %v1993
    %2080 = vmatprep.mubr.f32.mxu0 %v1976
    %2081 = vmatmul.mubr.f32.gmra.mxu0 %v1975
    %v2082 = vpop.f32.mrf.mxu0
    %v2083 = vadd.f32 %v2014, %v2082
    %v2084 = vpop.f32.mrf.mxu0
    %2085 = vdwg.mxu0
    %2086 = vst [vmem:[#allocation16] sm:$0x3] %v2083
    // Predicated region
    $region86: #{_lambda_.1} parent=1 // pred_check
      _
    $region87: #{_lambda_.1} parent=1 // pred_check_branch
      %2088 = sbr.rel (0) target = $region89
    $region88: #{_lambda_.1} parent=1 // pred_region
      %s2090 = ssub.s32 32, 32
      %2091 = vsyncadd [#allocation4], %s2090
      %s2093 = sshll.u32 [#allocation16], 4
      %s2094 = int_to_ptr.vmem [resolvable:$true] %s2093
      %2096 = dma.vmem_to_hbm [thread:$0]  %s2094, 32, %s13, [#allocation4]
    $region89: #{_lambda_.1} parent=1 // pred_fallthru
      _
    // Predicated region
    $region90: #{_lambda_.1} parent=1 // pred_check
      _
    $region91: #{_lambda_.1} parent=1 // pred_check_branch
      %2098 = sbr.rel (0) target = $region93
    $region92: #{_lambda_.1} parent=1 // pred_region
      %2099 = dma.done [#allocation4], 32
    $region93: #{_lambda_.1} parent=1 // pred_fallthru
      _
    %2100 = vsyncpa [#allocation3], 1
    %2101 = vsyncpa [#allocation6], 1
    %2102 = vsyncpa [#allocation9], 1
    %2103 = vsyncpa [#allocation12], 1
    %2104 = vsyncpa [#allocation15], 1
    %2105 = vsyncpa [#allocation4], 1

</llo_original>
